<compile_context>
chip_gen: v5e
topology: v5e:2x2
jax: 0.10.0
libtpu: 0.0.40
codegen_flags: <defaults>
</compile_context>

<pallas_src>
import math

import jax
import jax.numpy as jnp
import numpy as np
from jax import lax
from jax.experimental import pallas as pl
from jax.experimental.pallas import tpu as pltpu

EPS = 1e-5
LANE = 128


# ------------------------- fused Pallas kernel -------------------------

def make_fused_stage_kernel(N, H, W, cin_p, cout_p):
    """Build a fused conv3x3 + BatchNorm(train) + ReLU kernel for fixed shapes.

    Layout: input  xp_ref  (N*(H+2), (W+2)*cin_p)   spatially zero-padded NHWC, folded 2D
            weight wblk_ref (9, W*cin_p, W*cout_p)  block-diagonal per (dy,dx) tap
            output o_ref    (N*H, W*cout_p)         lane-dense (last dim multiple of 128)
    """
    K_lane = W * cin_p     # contraction width (multiple of 128 for these shapes)
    C_lane = W * cout_p    # output lane width (multiple of 128)
    rows = N * H
    inv_count = 1.0 / float(N * H * W)

    def kernel(xp_ref, wblk_ref, gamma_ref, beta_ref, o_ref):
        # ---- conv: accumulate 9 shifted block-diagonal matmuls on the MXU ----
        # (For large shapes: cast lhs / wblk_ref[k] to bf16 here and keep f32
        #  accumulation for the v6e/v7x bf16 MXU path; f32 kept for demo fidelity.)
        acc = None
        for k in range(9):
            dy, dx = divmod(k, 3)
            c0 = dx * cin_p
            lhs = jnp.concatenate(
                [xp_ref[n * (H + 2) + dy: n * (H + 2) + dy + H, c0: c0 + K_lane]
                 for n in range(N)],
                axis=0)                                              # (N*H, K_lane)
            part = jnp.dot(lhs, wblk_ref[k],
                           preferred_element_type=jnp.float32)       # (N*H, C_lane)
            acc = part if acc is None else acc + part

        # ---- BatchNorm batch statistics (training mode), on the MXU ----
        ones_row = jnp.ones((1, rows), jnp.float32)
        ii = lax.broadcasted_iota(jnp.int32, (C_lane, C_lane), 0)
        jj = lax.broadcasted_iota(jnp.int32, (C_lane, C_lane), 1)
        # R sums over the spatial-x replication and re-broadcasts per channel.
        R = jnp.where((ii % cout_p) == (jj % cout_p), 1.0, 0.0)

        col_sum = jnp.dot(ones_row, acc, preferred_element_type=jnp.float32)
        mean_t = jnp.dot(col_sum, R, preferred_element_type=jnp.float32) * inv_count
        centered = acc - mean_t                                       # exact two-pass
        col_sq = jnp.dot(ones_row, centered * centered,
                         preferred_element_type=jnp.float32)
        var_t = jnp.dot(col_sq, R, preferred_element_type=jnp.float32) * inv_count

        # ---- BN affine + ReLU, single lane-dense store ----
        inv_t = gamma_ref[...] * lax.rsqrt(var_t + EPS)
        o_ref[...] = jnp.maximum(centered * inv_t + beta_ref[...], 0.0)

    return kernel


# ------------------------- host-side prep (plain JAX glue) -------------------------

def _pad_channels_for_lanes(c, w):
    """Smallest c_p >= c such that w * c_p is a multiple of 128 lanes."""
    step = LANE // math.gcd(LANE, w)
    return int(math.ceil(c / step) * step)


def _prep_input(x_nhwc, cin_p):
    """Zero-pad spatially (3x3 'same') and channels; fold to (N*(H+2), (W+2)*cin_p)."""
    N, H, W, C = x_nhwc.shape
    xp = jnp.pad(x_nhwc, ((0, 0), (1, 1), (1, 1), (0, cin_p - C)))
    return xp.reshape(N * (H + 2), (W + 2) * cin_p)


def _prep_weight(w_oihw, cin_p, cout_p, W):
    """PyTorch (out,in,3,3) conv weight -> 9 block-diagonal (W*cin_p, W*cout_p) mats."""
    cout, cin = w_oihw.shape[0], w_oihw.shape[1]
    wt = jnp.transpose(w_oihw, (2, 3, 1, 0)).reshape(9, cin, cout)          # (k, ci, co)
    wp = jnp.zeros((9, cin_p, cout_p), jnp.float32).at[:, :cin, :cout].set(wt)
    eye = jnp.eye(W, dtype=jnp.float32)
    wblk = jnp.einsum('xz,kio->kxizo', eye, wp)                             # (9,W,ci,W,co)
    return wblk.reshape(9, W * cin_p, W * cout_p)


def _prep_affine(vec, c_p, W):
    """Per-channel BN param -> zero-padded and tiled across x: (1, W*c_p)."""
    v = jnp.zeros((c_p,), jnp.float32).at[:vec.shape[0]].set(vec.astype(jnp.float32))
    return jnp.tile(v, (W,)).reshape(1, W * c_p)


def fused_stage(x_nhwc, w_oihw, gamma, beta):
    """conv3x3 'same' (bias absorbed by train-mode BN) -> BatchNorm -> ReLU."""
    N, H, W, Cin = x_nhwc.shape
    Cout = w_oihw.shape[0]
    cin_p = _pad_channels_for_lanes(Cin, W)
    cout_p = _pad_channels_for_lanes(Cout, W)

    xp2 = _prep_input(x_nhwc.astype(jnp.float32), cin_p)
    wblk = _prep_weight(w_oihw.astype(jnp.float32), cin_p, cout_p, W)
    gt = _prep_affine(gamma, cout_p, W)
    bt = _prep_affine(beta, cout_p, W)

    K_lane = W * cin_p
    C_lane = W * cout_p
    kernel = make_fused_stage_kernel(N, H, W, cin_p, cout_p)

    y = pl.pallas_call(
        kernel,
        out_shape=jax.ShapeDtypeStruct((N * H, C_lane), jnp.float32),
        grid_spec=pltpu.PrefetchScalarGridSpec(
            num_scalar_prefetch=0,
            grid=(1,),   # single VMEM-resident step; BN needs global stats anyway
            in_specs=[
                pl.BlockSpec((N * (H + 2), (W + 2) * cin_p), lambda i: (0, 0)),
                pl.BlockSpec((9, K_lane, C_lane), lambda i: (0, 0, 0)),
                pl.BlockSpec((1, C_lane), lambda i: (0, 0)),
                pl.BlockSpec((1, C_lane), lambda i: (0, 0)),
            ],
            out_specs=pl.BlockSpec((N * H, C_lane), lambda i: (0, 0))),
        compiler_params=pltpu.CompilerParams(
            dimension_semantics=("arbitrary",)),
    )(xp2, wblk, gt, bt)

    return y.reshape(N, H, W, cout_p)[..., :Cout]


def conv2d_block_forward(x_nchw, params):
    """Pallas implementation of Conv2dBlock.forward (training-mode BatchNorm)."""
    x = jnp.transpose(x_nchw, (0, 2, 3, 1)).astype(jnp.float32)     # NHWC
    # Conv biases (params["b1"], params["b2"]) are intentionally unused here:
    # a per-channel conv bias cancels exactly through train-mode BatchNorm.
    h1 = fused_stage(x, params["w1"], params["g1"], params["be1"])
    h2 = fused_stage(h1, params["w2"], params["g2"], params["be2"])
    return jnp.transpose(h2, (0, 3, 1, 2))                          # back to NCHW


# ------------------------- pure-JAX reference -------------------------

def ref_forward(x_nchw, params):
    def stage(x, w, b, gamma, beta):
        y = lax.conv_general_dilated(
            x, w, window_strides=(1, 1), padding="SAME",
            dimension_numbers=("NCHW", "OIHW", "NCHW"),
            precision=lax.Precision.HIGHEST)
        y = y + b[None, :, None, None]
        mean = y.mean(axis=(0, 2, 3), keepdims=True)
        var = y.var(axis=(0, 2, 3), keepdims=True)       # biased var (PyTorch BN)
        y = (y - mean) / jnp.sqrt(var + EPS)
        y = y * gamma[None, :, None, None] + beta[None, :, None, None]
        return jnp.maximum(y, 0.0)

    h1 = stage(x_nchw, params["w1"], params["b1"], params["g1"], params["be1"])
    return stage(h1, params["w2"], params["b2"], params["g2"], params["be2"])


# ------------------------- main -------------------------

if __name__ == "__main__":
    N, in_c, out_c, H, W = 2, 4, 8, 16, 16

    key = jax.random.PRNGKey(0)
    kx, kw1, kb1, kw2, kb2 = jax.random.split(key, 5)

    x = jax.random.normal(kx, (N, in_c, H, W), dtype=jnp.float32)

    params = {
        "w1": 0.1 * jax.random.normal(kw1, (out_c, in_c, 3, 3), dtype=jnp.float32),
        "b1": 0.1 * jax.random.normal(kb1, (out_c,), dtype=jnp.float32),
        "g1": jnp.ones((out_c,), jnp.float32),    # BatchNorm2d default weight
        "be1": jnp.zeros((out_c,), jnp.float32),  # BatchNorm2d default bias
        "w2": 0.1 * jax.random.normal(kw2, (out_c, out_c, 3, 3), dtype=jnp.float32),
        "b2": 0.1 * jax.random.normal(kb2, (out_c,), dtype=jnp.float32),
        "g2": jnp.ones((out_c,), jnp.float32),
        "be2": jnp.zeros((out_c,), jnp.float32),
    }

    out = jax.block_until_ready(jax.jit(conv2d_block_forward)(x, params))
    ref = jax.block_until_ready(ref_forward(x, params))

    assert out.shape == (N, out_c, H, W)
    np.testing.assert_allclose(np.asarray(out), np.asarray(ref), rtol=5e-4, atol=5e-4)
    print("KERNEL_OK")
</pallas_src>

<mosaic_0001>
module attributes {stable_mosaic.version = 11 : i64} {
  func.func @kernel(%arg0: i32, %arg1: memref<36x144xf32, #tpu.memory_space<vmem>>, %arg2: memref<9x128x128xf32, #tpu.memory_space<vmem>>, %arg3: memref<1x128xf32, #tpu.memory_space<vmem>>, %arg4: memref<1x128xf32, #tpu.memory_space<vmem>>, %arg5: memref<32x128xf32, #tpu.memory_space<vmem>>) attributes {dimension_semantics = [#tpu.dimension_semantics<arbitrary>], iteration_bounds = array<i64: 1>, scalar_prefetch = 0 : i64, scratch_operands = 0 : i64, tpu.core_type = #tpu.core_type<tc>, window_params = [{pipeline_mode = #tpu.pipeline_mode<synchronous>, transform_indices = @transform_0, window_bounds = array<i64: 36, 144>}, {pipeline_mode = #tpu.pipeline_mode<synchronous>, transform_indices = @transform_1, window_bounds = array<i64: 9, 128, 128>}, {pipeline_mode = #tpu.pipeline_mode<synchronous>, transform_indices = @transform_2, window_bounds = array<i64: 1, 128>}, {pipeline_mode = #tpu.pipeline_mode<synchronous>, transform_indices = @transform_3, window_bounds = array<i64: 1, 128>}, {pipeline_mode = #tpu.pipeline_mode<synchronous>, transform_indices = @transform_4, window_bounds = array<i64: 32, 128>}]} {
    %c0 = arith.constant 0 : index
    %c0_0 = arith.constant 0 : index
    %0 = vector.load %arg1[%c0, %c0_0] : memref<36x144xf32, #tpu.memory_space<vmem>>, vector<16x128xf32>
    %c18 = arith.constant 18 : index
    %c0_1 = arith.constant 0 : index
    %1 = vector.load %arg1[%c18, %c0_1] : memref<36x144xf32, #tpu.memory_space<vmem>>, vector<16x128xf32>
    %2 = tpu.concatenate %0, %1 in 0 : vector<16x128xf32>, vector<16x128xf32> -> vector<32x128xf32>
    %c0_2 = arith.constant 0 : index
    %c0_3 = arith.constant 0 : index
    %c0_4 = arith.constant 0 : index
    %3 = vector.load %arg2[%c0_2, %c0_3, %c0_4] : memref<9x128x128xf32, #tpu.memory_space<vmem>>, vector<1x128x128xf32>
    %4 = vector.shape_cast %3 : vector<1x128x128xf32> to vector<128x128xf32>
    %cst = arith.constant dense<0.000000e+00> : vector<32x128xf32>
    %5 = tpu.matmul %2, %4, %cst {dimension_numbers = #tpu.dot_dimension_numbers<[1], [0], [0], [1], [0, 0, 1, 1], [], []>} : vector<32x128xf32>, vector<128x128xf32>, vector<32x128xf32> -> vector<32x128xf32>
    %c0_5 = arith.constant 0 : index
    %c8 = arith.constant 8 : index
    %6 = vector.load %arg1[%c0_5, %c8] : memref<36x144xf32, #tpu.memory_space<vmem>>, vector<16x128xf32>
    %c18_6 = arith.constant 18 : index
    %c8_7 = arith.constant 8 : index
    %7 = vector.load %arg1[%c18_6, %c8_7] : memref<36x144xf32, #tpu.memory_space<vmem>>, vector<16x128xf32>
    %8 = tpu.concatenate %6, %7 in 0 : vector<16x128xf32>, vector<16x128xf32> -> vector<32x128xf32>
    %c1 = arith.constant 1 : index
    %c0_8 = arith.constant 0 : index
    %c0_9 = arith.constant 0 : index
    %9 = vector.load %arg2[%c1, %c0_8, %c0_9] : memref<9x128x128xf32, #tpu.memory_space<vmem>>, vector<1x128x128xf32>
    %10 = vector.shape_cast %9 : vector<1x128x128xf32> to vector<128x128xf32>
    %cst_10 = arith.constant dense<0.000000e+00> : vector<32x128xf32>
    %11 = tpu.matmul %8, %10, %cst_10 {dimension_numbers = #tpu.dot_dimension_numbers<[1], [0], [0], [1], [0, 0, 1, 1], [], []>} : vector<32x128xf32>, vector<128x128xf32>, vector<32x128xf32> -> vector<32x128xf32>
    %12 = arith.addf %5, %11 : vector<32x128xf32>
    %c0_11 = arith.constant 0 : index
    %c16 = arith.constant 16 : index
    %13 = vector.load %arg1[%c0_11, %c16] : memref<36x144xf32, #tpu.memory_space<vmem>>, vector<16x128xf32>
    %c18_12 = arith.constant 18 : index
    %c16_13 = arith.constant 16 : index
    %14 = vector.load %arg1[%c18_12, %c16_13] : memref<36x144xf32, #tpu.memory_space<vmem>>, vector<16x128xf32>
    %15 = tpu.concatenate %13, %14 in 0 : vector<16x128xf32>, vector<16x128xf32> -> vector<32x128xf32>
    %c2 = arith.constant 2 : index
    %c0_14 = arith.constant 0 : index
    %c0_15 = arith.constant 0 : index
    %16 = vector.load %arg2[%c2, %c0_14, %c0_15] : memref<9x128x128xf32, #tpu.memory_space<vmem>>, vector<1x128x128xf32>
    %17 = vector.shape_cast %16 : vector<1x128x128xf32> to vector<128x128xf32>
    %cst_16 = arith.constant dense<0.000000e+00> : vector<32x128xf32>
    %18 = tpu.matmul %15, %17, %cst_16 {dimension_numbers = #tpu.dot_dimension_numbers<[1], [0], [0], [1], [0, 0, 1, 1], [], []>} : vector<32x128xf32>, vector<128x128xf32>, vector<32x128xf32> -> vector<32x128xf32>
    %19 = arith.addf %12, %18 : vector<32x128xf32>
    %c1_17 = arith.constant 1 : index
    %c0_18 = arith.constant 0 : index
    %20 = vector.load %arg1[%c1_17, %c0_18] : memref<36x144xf32, #tpu.memory_space<vmem>>, vector<16x128xf32>
    %c19 = arith.constant 19 : index
    %c0_19 = arith.constant 0 : index
    %21 = vector.load %arg1[%c19, %c0_19] : memref<36x144xf32, #tpu.memory_space<vmem>>, vector<16x128xf32>
    %22 = tpu.concatenate %20, %21 in 0 : vector<16x128xf32>, vector<16x128xf32> -> vector<32x128xf32>
    %c3 = arith.constant 3 : index
    %c0_20 = arith.constant 0 : index
    %c0_21 = arith.constant 0 : index
    %23 = vector.load %arg2[%c3, %c0_20, %c0_21] : memref<9x128x128xf32, #tpu.memory_space<vmem>>, vector<1x128x128xf32>
    %24 = vector.shape_cast %23 : vector<1x128x128xf32> to vector<128x128xf32>
    %cst_22 = arith.constant dense<0.000000e+00> : vector<32x128xf32>
    %25 = tpu.matmul %22, %24, %cst_22 {dimension_numbers = #tpu.dot_dimension_numbers<[1], [0], [0], [1], [0, 0, 1, 1], [], []>} : vector<32x128xf32>, vector<128x128xf32>, vector<32x128xf32> -> vector<32x128xf32>
    %26 = arith.addf %19, %25 : vector<32x128xf32>
    %c1_23 = arith.constant 1 : index
    %c8_24 = arith.constant 8 : index
    %27 = vector.load %arg1[%c1_23, %c8_24] : memref<36x144xf32, #tpu.memory_space<vmem>>, vector<16x128xf32>
    %c19_25 = arith.constant 19 : index
    %c8_26 = arith.constant 8 : index
    %28 = vector.load %arg1[%c19_25, %c8_26] : memref<36x144xf32, #tpu.memory_space<vmem>>, vector<16x128xf32>
    %29 = tpu.concatenate %27, %28 in 0 : vector<16x128xf32>, vector<16x128xf32> -> vector<32x128xf32>
    %c4 = arith.constant 4 : index
    %c0_27 = arith.constant 0 : index
    %c0_28 = arith.constant 0 : index
    %30 = vector.load %arg2[%c4, %c0_27, %c0_28] : memref<9x128x128xf32, #tpu.memory_space<vmem>>, vector<1x128x128xf32>
    %31 = vector.shape_cast %30 : vector<1x128x128xf32> to vector<128x128xf32>
    %cst_29 = arith.constant dense<0.000000e+00> : vector<32x128xf32>
    %32 = tpu.matmul %29, %31, %cst_29 {dimension_numbers = #tpu.dot_dimension_numbers<[1], [0], [0], [1], [0, 0, 1, 1], [], []>} : vector<32x128xf32>, vector<128x128xf32>, vector<32x128xf32> -> vector<32x128xf32>
    %33 = arith.addf %26, %32 : vector<32x128xf32>
    %c1_30 = arith.constant 1 : index
    %c16_31 = arith.constant 16 : index
    %34 = vector.load %arg1[%c1_30, %c16_31] : memref<36x144xf32, #tpu.memory_space<vmem>>, vector<16x128xf32>
    %c19_32 = arith.constant 19 : index
    %c16_33 = arith.constant 16 : index
    %35 = vector.load %arg1[%c19_32, %c16_33] : memref<36x144xf32, #tpu.memory_space<vmem>>, vector<16x128xf32>
    %36 = tpu.concatenate %34, %35 in 0 : vector<16x128xf32>, vector<16x128xf32> -> vector<32x128xf32>
    %c5 = arith.constant 5 : index
    %c0_34 = arith.constant 0 : index
    %c0_35 = arith.constant 0 : index
    %37 = vector.load %arg2[%c5, %c0_34, %c0_35] : memref<9x128x128xf32, #tpu.memory_space<vmem>>, vector<1x128x128xf32>
    %38 = vector.shape_cast %37 : vector<1x128x128xf32> to vector<128x128xf32>
    %cst_36 = arith.constant dense<0.000000e+00> : vector<32x128xf32>
    %39 = tpu.matmul %36, %38, %cst_36 {dimension_numbers = #tpu.dot_dimension_numbers<[1], [0], [0], [1], [0, 0, 1, 1], [], []>} : vector<32x128xf32>, vector<128x128xf32>, vector<32x128xf32> -> vector<32x128xf32>
    %40 = arith.addf %33, %39 : vector<32x128xf32>
    %c2_37 = arith.constant 2 : index
    %c0_38 = arith.constant 0 : index
    %41 = vector.load %arg1[%c2_37, %c0_38] : memref<36x144xf32, #tpu.memory_space<vmem>>, vector<16x128xf32>
    %c20 = arith.constant 20 : index
    %c0_39 = arith.constant 0 : index
    %42 = vector.load %arg1[%c20, %c0_39] : memref<36x144xf32, #tpu.memory_space<vmem>>, vector<16x128xf32>
    %43 = tpu.concatenate %41, %42 in 0 : vector<16x128xf32>, vector<16x128xf32> -> vector<32x128xf32>
    %c6 = arith.constant 6 : index
    %c0_40 = arith.constant 0 : index
    %c0_41 = arith.constant 0 : index
    %44 = vector.load %arg2[%c6, %c0_40, %c0_41] : memref<9x128x128xf32, #tpu.memory_space<vmem>>, vector<1x128x128xf32>
    %45 = vector.shape_cast %44 : vector<1x128x128xf32> to vector<128x128xf32>
    %cst_42 = arith.constant dense<0.000000e+00> : vector<32x128xf32>
    %46 = tpu.matmul %43, %45, %cst_42 {dimension_numbers = #tpu.dot_dimension_numbers<[1], [0], [0], [1], [0, 0, 1, 1], [], []>} : vector<32x128xf32>, vector<128x128xf32>, vector<32x128xf32> -> vector<32x128xf32>
    %47 = arith.addf %40, %46 : vector<32x128xf32>
    %c2_43 = arith.constant 2 : index
    %c8_44 = arith.constant 8 : index
    %48 = vector.load %arg1[%c2_43, %c8_44] : memref<36x144xf32, #tpu.memory_space<vmem>>, vector<16x128xf32>
    %c20_45 = arith.constant 20 : index
    %c8_46 = arith.constant 8 : index
    %49 = vector.load %arg1[%c20_45, %c8_46] : memref<36x144xf32, #tpu.memory_space<vmem>>, vector<16x128xf32>
    %50 = tpu.concatenate %48, %49 in 0 : vector<16x128xf32>, vector<16x128xf32> -> vector<32x128xf32>
    %c7 = arith.constant 7 : index
    %c0_47 = arith.constant 0 : index
    %c0_48 = arith.constant 0 : index
    %51 = vector.load %arg2[%c7, %c0_47, %c0_48] : memref<9x128x128xf32, #tpu.memory_space<vmem>>, vector<1x128x128xf32>
    %52 = vector.shape_cast %51 : vector<1x128x128xf32> to vector<128x128xf32>
    %cst_49 = arith.constant dense<0.000000e+00> : vector<32x128xf32>
    %53 = tpu.matmul %50, %52, %cst_49 {dimension_numbers = #tpu.dot_dimension_numbers<[1], [0], [0], [1], [0, 0, 1, 1], [], []>} : vector<32x128xf32>, vector<128x128xf32>, vector<32x128xf32> -> vector<32x128xf32>
    %54 = arith.addf %47, %53 : vector<32x128xf32>
    %c2_50 = arith.constant 2 : index
    %c16_51 = arith.constant 16 : index
    %55 = vector.load %arg1[%c2_50, %c16_51] : memref<36x144xf32, #tpu.memory_space<vmem>>, vector<16x128xf32>
    %c20_52 = arith.constant 20 : index
    %c16_53 = arith.constant 16 : index
    %56 = vector.load %arg1[%c20_52, %c16_53] : memref<36x144xf32, #tpu.memory_space<vmem>>, vector<16x128xf32>
    %57 = tpu.concatenate %55, %56 in 0 : vector<16x128xf32>, vector<16x128xf32> -> vector<32x128xf32>
    %c8_54 = arith.constant 8 : index
    %c0_55 = arith.constant 0 : index
    %c0_56 = arith.constant 0 : index
    %58 = vector.load %arg2[%c8_54, %c0_55, %c0_56] : memref<9x128x128xf32, #tpu.memory_space<vmem>>, vector<1x128x128xf32>
    %59 = vector.shape_cast %58 : vector<1x128x128xf32> to vector<128x128xf32>
    %cst_57 = arith.constant dense<0.000000e+00> : vector<32x128xf32>
    %60 = tpu.matmul %57, %59, %cst_57 {dimension_numbers = #tpu.dot_dimension_numbers<[1], [0], [0], [1], [0, 0, 1, 1], [], []>} : vector<32x128xf32>, vector<128x128xf32>, vector<32x128xf32> -> vector<32x128xf32>
    %61 = arith.addf %54, %60 : vector<32x128xf32>
    %cst_58 = arith.constant 1.000000e+00 : f32
    %62 = vector.broadcast %cst_58 : f32 to vector<1x32xf32>
    %63 = tpu.iota {dimensions = array<i32: 0>} : vector<128x128xi32>
    %64 = tpu.iota {dimensions = array<i32: 1>} : vector<128x128xi32>
    %c8_i32 = arith.constant 8 : i32
    %c0_i32 = arith.constant 0 : i32
    %65 = arith.cmpi eq, %c8_i32, %c0_i32 : i32
    %c1_i32 = arith.constant 1 : i32
    %66 = arith.select %65, %c1_i32, %c8_i32 : i32
    %67 = vector.broadcast %66 : i32 to vector<128x128xi32>
    %68 = arith.remsi %63, %67 : vector<128x128xi32>
    %c0_i32_59 = arith.constant 0 : i32
    %69 = vector.broadcast %c0_i32_59 : i32 to vector<128x128xi32>
    %70 = arith.cmpi ne, %68, %69 : vector<128x128xi32>
    %c0_i32_60 = arith.constant 0 : i32
    %71 = vector.broadcast %c0_i32_60 : i32 to vector<128x128xi32>
    %72 = arith.cmpi slt, %68, %71 : vector<128x128xi32>
    %c0_i32_61 = arith.constant 0 : i32
    %73 = arith.cmpi slt, %66, %c0_i32_61 : i32
    %74 = vector.broadcast %73 : i1 to vector<128x128xi1>
    %75 = vector.broadcast %74 : vector<128x128xi1> to vector<128x128xi1>
    %76 = arith.xori %72, %75 : vector<128x128xi1>
    %77 = arith.andi %76, %70 : vector<128x128xi1>
    %78 = vector.broadcast %66 : i32 to vector<128x128xi32>
    %79 = arith.addi %68, %78 : vector<128x128xi32>
    %80 = arith.select %77, %79, %68 : vector<128x128xi1>, vector<128x128xi32>
    %c8_i32_62 = arith.constant 8 : i32
    %c0_i32_63 = arith.constant 0 : i32
    %81 = arith.cmpi eq, %c8_i32_62, %c0_i32_63 : i32
    %c1_i32_64 = arith.constant 1 : i32
    %82 = arith.select %81, %c1_i32_64, %c8_i32_62 : i32
    %83 = vector.broadcast %82 : i32 to vector<128x128xi32>
    %84 = arith.remsi %64, %83 : vector<128x128xi32>
    %c0_i32_65 = arith.constant 0 : i32
    %85 = vector.broadcast %c0_i32_65 : i32 to vector<128x128xi32>
    %86 = arith.cmpi ne, %84, %85 : vector<128x128xi32>
    %c0_i32_66 = arith.constant 0 : i32
    %87 = vector.broadcast %c0_i32_66 : i32 to vector<128x128xi32>
    %88 = arith.cmpi slt, %84, %87 : vector<128x128xi32>
    %c0_i32_67 = arith.constant 0 : i32
    %89 = arith.cmpi slt, %82, %c0_i32_67 : i32
    %90 = vector.broadcast %89 : i1 to vector<128x128xi1>
    %91 = vector.broadcast %90 : vector<128x128xi1> to vector<128x128xi1>
    %92 = arith.xori %88, %91 : vector<128x128xi1>
    %93 = arith.andi %92, %86 : vector<128x128xi1>
    %94 = vector.broadcast %82 : i32 to vector<128x128xi32>
    %95 = arith.addi %84, %94 : vector<128x128xi32>
    %96 = arith.select %93, %95, %84 : vector<128x128xi1>, vector<128x128xi32>
    %97 = arith.cmpi eq, %80, %96 : vector<128x128xi32>
    %cst_68 = arith.constant 1.000000e+00 : f32
    %cst_69 = arith.constant 0.000000e+00 : f32
    %98 = vector.broadcast %cst_68 : f32 to vector<128x128xf32>
    %99 = vector.broadcast %cst_69 : f32 to vector<128x128xf32>
    %100 = arith.select %97, %98, %99 : vector<128x128xi1>, vector<128x128xf32>
    %cst_70 = arith.constant dense<0.000000e+00> : vector<1x128xf32>
    %101 = tpu.matmul %62, %61, %cst_70 {dimension_numbers = #tpu.dot_dimension_numbers<[1], [0], [0], [1], [0, 0, 1, 1], [], []>} : vector<1x32xf32>, vector<32x128xf32>, vector<1x128xf32> -> vector<1x128xf32>
    %cst_71 = arith.constant dense<0.000000e+00> : vector<1x128xf32>
    %102 = tpu.matmul %101, %100, %cst_71 {dimension_numbers = #tpu.dot_dimension_numbers<[1], [0], [0], [1], [0, 0, 1, 1], [], []>} : vector<1x128xf32>, vector<128x128xf32>, vector<1x128xf32> -> vector<1x128xf32>
    %cst_72 = arith.constant 0.001953125 : f32
    %103 = vector.broadcast %cst_72 : f32 to vector<1x128xf32>
    %104 = arith.mulf %102, %103 : vector<1x128xf32>
    %105 = vector.broadcast %104 : vector<1x128xf32> to vector<32x128xf32>
    %106 = arith.subf %61, %105 : vector<32x128xf32>
    %107 = arith.mulf %106, %106 : vector<32x128xf32>
    %cst_73 = arith.constant dense<0.000000e+00> : vector<1x128xf32>
    %108 = tpu.matmul %62, %107, %cst_73 {dimension_numbers = #tpu.dot_dimension_numbers<[1], [0], [0], [1], [0, 0, 1, 1], [], []>} : vector<1x32xf32>, vector<32x128xf32>, vector<1x128xf32> -> vector<1x128xf32>
    %cst_74 = arith.constant dense<0.000000e+00> : vector<1x128xf32>
    %109 = tpu.matmul %108, %100, %cst_74 {dimension_numbers = #tpu.dot_dimension_numbers<[1], [0], [0], [1], [0, 0, 1, 1], [], []>} : vector<1x128xf32>, vector<128x128xf32>, vector<1x128xf32> -> vector<1x128xf32>
    %cst_75 = arith.constant 0.001953125 : f32
    %110 = vector.broadcast %cst_75 : f32 to vector<1x128xf32>
    %111 = arith.mulf %109, %110 : vector<1x128xf32>
    %c0_76 = arith.constant 0 : index
    %c0_77 = arith.constant 0 : index
    %112 = vector.load %arg3[%c0_76, %c0_77] : memref<1x128xf32, #tpu.memory_space<vmem>>, vector<1x128xf32>
    %cst_78 = arith.constant 9.99999974E-6 : f32
    %113 = vector.broadcast %cst_78 : f32 to vector<1x128xf32>
    %114 = arith.addf %111, %113 : vector<1x128xf32>
    %115 = math.rsqrt %114 : vector<1x128xf32>
    %116 = arith.mulf %112, %115 : vector<1x128xf32>
    %117 = vector.broadcast %116 : vector<1x128xf32> to vector<32x128xf32>
    %118 = arith.mulf %106, %117 : vector<32x128xf32>
    %c0_79 = arith.constant 0 : index
    %c0_80 = arith.constant 0 : index
    %119 = vector.load %arg4[%c0_79, %c0_80] : memref<1x128xf32, #tpu.memory_space<vmem>>, vector<1x128xf32>
    %120 = vector.broadcast %119 : vector<1x128xf32> to vector<32x128xf32>
    %121 = arith.addf %118, %120 : vector<32x128xf32>
    %cst_81 = arith.constant 0.000000e+00 : f32
    %122 = vector.broadcast %cst_81 : f32 to vector<32x128xf32>
    %123 = arith.maximumf %121, %122 : vector<32x128xf32>
    %c0_82 = arith.constant 0 : index
    %c0_83 = arith.constant 0 : index
    %124 = vector.load %arg5[%c0_82, %c0_83] : memref<32x128xf32, #tpu.memory_space<vmem>>, vector<32x128xf32>
    tpu.vector_store %arg5[%c0_82, %c0_83], %123 {strides = array<i32>} : memref<32x128xf32, #tpu.memory_space<vmem>>, vector<32x128xf32>,
    return
  }
  func.func @transform_0(%arg0: i32) -> (i32, i32) {
    %c0_i32 = arith.constant 0 : i32
    %c0_i32_0 = arith.constant 0 : i32
    %c0_i32_1 = arith.constant 0 : i32
    return %c0_i32, %c0_i32_0 : i32, i32
  }
  func.func @transform_1(%arg0: i32) -> (i32, i32, i32) {
    %c0_i32 = arith.constant 0 : i32
    %c0_i32_0 = arith.constant 0 : i32
    %c0_i32_1 = arith.constant 0 : i32
    %c0_i32_2 = arith.constant 0 : i32
    return %c0_i32, %c0_i32_0, %c0_i32_1 : i32, i32, i32
  }
  func.func @transform_2(%arg0: i32) -> (i32, i32) {
    %c0_i32 = arith.constant 0 : i32
    %c0_i32_0 = arith.constant 0 : i32
    %c0_i32_1 = arith.constant 0 : i32
    return %c0_i32, %c0_i32_0 : i32, i32
  }
  func.func @transform_3(%arg0: i32) -> (i32, i32) {
    %c0_i32 = arith.constant 0 : i32
    %c0_i32_0 = arith.constant 0 : i32
    %c0_i32_1 = arith.constant 0 : i32
    return %c0_i32, %c0_i32_0 : i32, i32
  }
  func.func @transform_4(%arg0: i32) -> (i32, i32) {
    %c0_i32 = arith.constant 0 : i32
    %c0_i32_0 = arith.constant 0 : i32
    %c0_i32_1 = arith.constant 0 : i32
    return %c0_i32, %c0_i32_0 : i32, i32
  }
}

</mosaic_0001>

<llo_original>
// kernel: tile.23
$region0: #{tile.23}
  #allocation0 [shape = 's32[1]{0}', space=sflag, size = 0x4, scoped, tag = 'scoped memory for tile.23']
  %s0 = inlined_call_operand.vmem [shape: f32[8], index: 0, kind: input, shape index: {}]
  %s1 = inlined_call_operand.vmem [shape: f32[16,8], index: 1, kind: output, shape index: {}]
  // Predicated region
  $region2: #{tile.23} parent=0 // pred_check
    _
  $region3: #{tile.23} parent=0 // pred_check_branch
    %3 = sbr.rel (0) target = $region5
  $region4: #{tile.23} parent=0 // pred_region
    _
  $region5: #{tile.23} parent=0 // pred_fallthru
    _
  %v4 = vld [vmem:[%s0] ss:$0 sm:$0xff]
  %5 = vst [vmem:[%s1] sm:$0xff] %v4
  %s6 = scalar_lea.vmem %s1, 8
  %7 = vst [vmem:[%s6] sm:$0xff] %v4

// kernel: tile.24
$region0: #{tile.24}
  %s0 = inlined_call_operand.vmem [shape: f32[16,8], index: 0, kind: input, shape index: {}]
  %s1 = inlined_call_operand.vmem [shape: f32[1,128], index: 1, kind: output, shape index: {}]
  $region1: #{tile.24} parent=0
    #allocation0 [shape = 'u8[4096]{0}', space=vmem, size = 0x1000, scoped, tag = 'scoped mem for output reshape']
    %v2 = vld [vmem:[%s0] sm:$0x1]
    %vm3 = vcmask 64512
    %4 = vst.msk [vmem:[#allocation0] sm:$0x1] %vm3, %v2
    %s5 = scalar_lea.vmem %s0, 15
    %v6 = vld [vmem:[%s5] sm:$0x1]
    %7 = vrot.lane.b32.xlu0 %v6, 120
    %v8 = vpop.permute.xlu0 %7
    %vm9 = vcmask 1048512
    %10 = vst.msk [vmem:[#allocation0] sm:$0x1] %vm9, %v8
    %s11 = scalar_lea.vmem %s0, 14
    %v12 = vld [vmem:[%s11] sm:$0x1]
    %13 = vrot.lane.b32.xlu0 %v12, 112
    %v14 = vpop.permute.xlu0 %13
    %vm15 = vcmask 982912
    %16 = vst.msk [vmem:[#allocation0] sm:$0x1] %vm15, %v14
    %s17 = scalar_lea.vmem %s0, 13
    %v18 = vld [vmem:[%s17] sm:$0x1]
    %19 = vrot.lane.b32.xlu0 %v18, 104
    %v20 = vpop.permute.xlu0 %19
    %vm21 = vcmask 917312
    %22 = vst.msk [vmem:[#allocation0] sm:$0x1] %vm21, %v20
    %s23 = scalar_lea.vmem %s0, 12
    %v24 = vld [vmem:[%s23] sm:$0x1]
    %25 = vrot.lane.b32.xlu0 %v24, 96
    %v26 = vpop.permute.xlu0 %25
    %vm27 = vcmask 851712
    %28 = vst.msk [vmem:[#allocation0] sm:$0x1] %vm27, %v26
    %s29 = scalar_lea.vmem %s0, 11
    %v30 = vld [vmem:[%s29] sm:$0x1]
    %31 = vrot.lane.b32.xlu0 %v30, 88
    %v32 = vpop.permute.xlu0 %31
    %vm33 = vcmask 786112
    %34 = vst.msk [vmem:[#allocation0] sm:$0x1] %vm33, %v32
    %s35 = scalar_lea.vmem %s0, 10
    %v36 = vld [vmem:[%s35] sm:$0x1]
    %37 = vrot.lane.b32.xlu0 %v36, 80
    %v38 = vpop.permute.xlu0 %37
    %vm39 = vcmask 720512
    %40 = vst.msk [vmem:[#allocation0] sm:$0x1] %vm39, %v38
    %s41 = scalar_lea.vmem %s0, 9
    %v42 = vld [vmem:[%s41] sm:$0x1]
    %43 = vrot.lane.b32.xlu0 %v42, 72
    %v44 = vpop.permute.xlu0 %43
    %vm45 = vcmask 654912
    %46 = vst.msk [vmem:[#allocation0] sm:$0x1] %vm45, %v44
    %s47 = scalar_lea.vmem %s0, 8
    %v48 = vld [vmem:[%s47] sm:$0x1]
    %49 = vrot.lane.b32.xlu0 %v48, 64
    %v50 = vpop.permute.xlu0 %49
    %vm51 = vcmask 589312
    %52 = vst.msk [vmem:[#allocation0] sm:$0x1] %vm51, %v50
    %s53 = scalar_lea.vmem %s0, 7
    %v54 = vld [vmem:[%s53] sm:$0x1]
    %55 = vrot.lane.b32.xlu0 %v54, 56
    %v56 = vpop.permute.xlu0 %55
    %vm57 = vcmask 523712
    %58 = vst.msk [vmem:[#allocation0] sm:$0x1] %vm57, %v56
    %s59 = scalar_lea.vmem %s0, 6
    %v60 = vld [vmem:[%s59] sm:$0x1]
    %61 = vrot.lane.b32.xlu0 %v60, 48
    %v62 = vpop.permute.xlu0 %61
    %vm63 = vcmask 458112
    %64 = vst.msk [vmem:[#allocation0] sm:$0x1] %vm63, %v62
    %s65 = scalar_lea.vmem %s0, 5
    %v66 = vld [vmem:[%s65] sm:$0x1]
    %67 = vrot.lane.b32.xlu0 %v66, 40
    %v68 = vpop.permute.xlu0 %67
    %vm69 = vcmask 392512
    %70 = vst.msk [vmem:[#allocation0] sm:$0x1] %vm69, %v68
    %s71 = scalar_lea.vmem %s0, 4
    %v72 = vld [vmem:[%s71] sm:$0x1]
    %73 = vrot.lane.b32.xlu0 %v72, 32
    %v74 = vpop.permute.xlu0 %73
    %vm75 = vcmask 326912
    %76 = vst.msk [vmem:[#allocation0] sm:$0x1] %vm75, %v74
    %s77 = scalar_lea.vmem %s0, 3
    %v78 = vld [vmem:[%s77] sm:$0x1]
    %79 = vrot.lane.b32.xlu0 %v78, 24
    %v80 = vpop.permute.xlu0 %79
    %vm81 = vcmask 261312
    %82 = vst.msk [vmem:[#allocation0] sm:$0x1] %vm81, %v80
    %s83 = scalar_lea.vmem %s0, 2
    %v84 = vld [vmem:[%s83] sm:$0x1]
    %85 = vrot.lane.b32.xlu0 %v84, 16
    %v86 = vpop.permute.xlu0 %85
    %vm87 = vcmask 195712
    %88 = vst.msk [vmem:[#allocation0] sm:$0x1] %vm87, %v86
    %s89 = scalar_lea.vmem %s0, 1
    %v90 = vld [vmem:[%s89] sm:$0x1]
    %91 = vrot.lane.b32.xlu0 %v90, 8
    %v92 = vpop.permute.xlu0 %91
    %vm93 = vcmask 130112
    %94 = vst.msk [vmem:[#allocation0] sm:$0x1] %vm93, %v92
    %s96 = ssub.s32 2, 1
    %v97 = vld [vmem:[#allocation0] sm:%s96]
    %s99 = ssub.s32 2, 1
    %100 = vst [vmem:[%s1] sm:%s99] %v97

// kernel: conv2d_block_forward.2
$region0: #{conv2d_block_forward.2}
  #allocation0 [shape = 'u32[]', space=smem, size = 0x4, offset = 0x4, fixed_abs, tag = 'smem constant byte address 0x4 - core index']
  #allocation1 [shape = 'u32[72,128]{1,0:T(1,128)}', space=vmem, size = 0x9000, scoped, tag = 'internal scratch']
  %s0 = inlined_call_operand.vmem [shape: f32[36,144], index: 0, kind: input, shape index: {}]
  %s1 = inlined_call_operand.vmem [shape: f32[9,128,128], index: 1, kind: input, shape index: {}]
  %s2 = inlined_call_operand.vmem [shape: f32[1,128], index: 2, kind: input, shape index: {}]
  %s3 = inlined_call_operand.vmem [shape: f32[1,128], index: 3, kind: input, shape index: {}]
  %s4 = inlined_call_operand.vmem [shape: f32[32,128], index: 4, kind: output, shape index: {}]
  %s5 = sld [smem:[#allocation0]]
  $region26: #{conv2d_block_forward.2} parent=0
    _
  %s7 = ssub.s32 1, %s5
  %s8 = scalar_select 0, %s7, %s5
  // Predicated region
  $region2: #{conv2d_block_forward.2} parent=0 // pred_check
    _
  $region3: #{conv2d_block_forward.2} parent=0 // pred_check_branch
    %10 = sbr.rel (0) target = $region5
  $region4: #{conv2d_block_forward.2} parent=0 // pred_region
    _
  $region5: #{conv2d_block_forward.2} parent=0 // pred_fallthru
    _
  // Predicated region
  $region6: #{conv2d_block_forward.2} parent=0 // pred_check
    _
  $region7: #{conv2d_block_forward.2} parent=0 // pred_check_branch
    %12 = sbr.rel (0) target = $region9
  $region8: #{conv2d_block_forward.2} parent=0 // pred_region
    _
  $region9: #{conv2d_block_forward.2} parent=0 // pred_fallthru
    _
  // Predicated region
  $region10: #{conv2d_block_forward.2} parent=0 // pred_check
    _
  $region11: #{conv2d_block_forward.2} parent=0 // pred_check_branch
    %14 = sbr.rel (0) target = $region13
  $region12: #{conv2d_block_forward.2} parent=0 // pred_region
    _
  $region13: #{conv2d_block_forward.2} parent=0 // pred_fallthru
    _
  // Predicated region
  $region14: #{conv2d_block_forward.2} parent=0 // pred_check
    _
  $region15: #{conv2d_block_forward.2} parent=0 // pred_check_branch
    %16 = sbr.rel (0) target = $region17
  $region16: #{conv2d_block_forward.2} parent=0 // pred_region
    _
  $region17: #{conv2d_block_forward.2} parent=0 // pred_fallthru
    _
  %v17 = vld [vmem:[%s0] sm:$0xff]
  %v18 = vld [vmem:[%s0 + $0x10] sm:$0xff]
  %v19 = vld [vmem:[%s0 + $0x20] sm:$0xfc]
  %v20 = vld [vmem:[%s0 + $0x30] sm:$0xff]
  %v21 = vld [vmem:[%s0 + $0x40] sm:$0x3]
  %vm25 = vcmask 1045504
  %v26 = vrot.slane %v19, 2
  %v27 = vrot.slane %v20, 2
  %v28 = vsel %vm25, %v26, %v27
  %v29 = vrot.slane %v21, 2
  %v30 = vsel %vm25, %v27, %v29
  %v33 = vld [vmem:[%s1] sm:$0xff]
  %v34 = vld [vmem:[%s1 + $0x8] sm:$0xff]
  %v35 = vld [vmem:[%s1 + $0x10] sm:$0xff]
  %v36 = vld [vmem:[%s1 + $0x18] sm:$0xff]
  %v37 = vld [vmem:[%s1 + $0x20] sm:$0xff]
  %v38 = vld [vmem:[%s1 + $0x28] sm:$0xff]
  %v39 = vld [vmem:[%s1 + $0x30] sm:$0xff]
  %v40 = vld [vmem:[%s1 + $0x38] sm:$0xff]
  %v41 = vld [vmem:[%s1 + $0x40] sm:$0xff]
  %v42 = vld [vmem:[%s1 + $0x48] sm:$0xff]
  %v43 = vld [vmem:[%s1 + $0x50] sm:$0xff]
  %v44 = vld [vmem:[%s1 + $0x58] sm:$0xff]
  %v45 = vld [vmem:[%s1 + $0x60] sm:$0xff]
  %v46 = vld [vmem:[%s1 + $0x68] sm:$0xff]
  %v47 = vld [vmem:[%s1 + $0x70] sm:$0xff]
  %v48 = vld [vmem:[%s1 + $0x78] sm:$0xff]
  %v49 = vld [vmem:[%s0 + $0x8] sm:$0xff]
  %v50 = vld [vmem:[%s0 + $0x18] sm:$0xff]
  %v51 = vld [vmem:[%s0 + $0x28] sm:$0xfc]
  %v52 = vld [vmem:[%s0 + $0x38] sm:$0xff]
  %v53 = vld [vmem:[%s0 + $0x48] sm:$0x3]
  %v57 = vrot.slane %v51, 2
  %v58 = vrot.slane %v52, 2
  %v59 = vsel %vm25, %v57, %v58
  %v60 = vrot.slane %v53, 2
  %v61 = vsel %vm25, %v58, %v60
  %s62 = scalar_lea.vmem %s1, 128
  %v63 = vld [vmem:[%s62] sm:$0xff]
  %v64 = vld [vmem:[%s62 + $0x8] sm:$0xff]
  %v65 = vld [vmem:[%s62 + $0x10] sm:$0xff]
  %v66 = vld [vmem:[%s62 + $0x18] sm:$0xff]
  %v67 = vld [vmem:[%s62 + $0x20] sm:$0xff]
  %v68 = vld [vmem:[%s62 + $0x28] sm:$0xff]
  %v69 = vld [vmem:[%s62 + $0x30] sm:$0xff]
  %v70 = vld [vmem:[%s62 + $0x38] sm:$0xff]
  %v71 = vld [vmem:[%s62 + $0x40] sm:$0xff]
  %v72 = vld [vmem:[%s62 + $0x48] sm:$0xff]
  %v73 = vld [vmem:[%s62 + $0x50] sm:$0xff]
  %v74 = vld [vmem:[%s62 + $0x58] sm:$0xff]
  %v75 = vld [vmem:[%s62 + $0x60] sm:$0xff]
  %v76 = vld [vmem:[%s62 + $0x68] sm:$0xff]
  %v77 = vld [vmem:[%s62 + $0x70] sm:$0xff]
  %v78 = vld [vmem:[%s62 + $0x78] sm:$0xff]
  %83 = vrot.lane.b32.xlu0 %v17, 120
  %v84 = vpop.permute.xlu0 %83
  %85 = vrot.lane.b32.xlu0 %v49, 120
  %v86 = vpop.permute.xlu0 %85
  %87 = vrot.lane.b32.xlu0 %v18, 120
  %v88 = vpop.permute.xlu0 %87
  %89 = vrot.lane.b32.xlu0 %v50, 120
  %v90 = vpop.permute.xlu0 %89
  %91 = vrot.lane.b32.xlu0 %v28, 120
  %v92 = vpop.permute.xlu0 %91
  %93 = vrot.lane.b32.xlu0 %v59, 120
  %v94 = vpop.permute.xlu0 %93
  %95 = vrot.lane.b32.xlu0 %v30, 120
  %v96 = vpop.permute.xlu0 %95
  %97 = vrot.lane.b32.xlu0 %v61, 120
  %v98 = vpop.permute.xlu0 %97
  %vm99 = vcmask 982016
  %v100 = vsel %vm99, %v84, %v86
  %v101 = vsel %vm99, %v88, %v90
  %v102 = vsel %vm99, %v92, %v94
  %v103 = vsel %vm99, %v96, %v98
  %108 = vmatpush.msra.mxu0 %v78
  %109 = vmatpush.msra.mxu0 %v77
  %110 = vmatpush.msra.mxu0 %v76
  %111 = vmatpush.msra.mxu0 %v75
  %112 = vmatpush.msra.mxu0 %v74
  %113 = vmatpush.msra.mxu0 %v73
  %114 = vmatpush.msra.mxu0 %v72
  %115 = vmatpush.msra.mxu0 %v71
  %116 = vmatpush.msra.mxu0 %v70
  %117 = vmatpush.msra.mxu0 %v69
  %118 = vmatpush.msra.mxu0 %v68
  %119 = vmatpush.msra.mxu0 %v67
  %120 = vmatpush.msra.mxu0 %v66
  %121 = vmatpush.msra.mxu0 %v65
  %122 = vmatpush.msra.mxu0 %v64
  %123 = vmatpush.msra.mxu0 %v63
  %124 = vmatmul.f32.gmra.mxu0 %v100
  %v125 = vpop.f32.mrf.mxu0
  %v126 = vadd.f32 0.0, %v125
  %127 = vmatmul.f32.gmra.mxu0 %v101
  %v128 = vpop.f32.mrf.mxu0
  %v129 = vadd.f32 0.0, %v128
  %130 = vmatmul.f32.gmra.mxu0 %v102
  %v131 = vpop.f32.mrf.mxu0
  %v132 = vadd.f32 0.0, %v131
  %133 = vmatmul.f32.gmra.mxu0 %v103
  %v134 = vpop.f32.mrf.mxu0
  %v135 = vadd.f32 0.0, %v134
  %136 = vdwg.mxu0
  %137 = vmatpush.msra.mxu0 %v48
  %138 = vmatpush.msra.mxu0 %v47
  %139 = vmatpush.msra.mxu0 %v46
  %140 = vmatpush.msra.mxu0 %v45
  %141 = vmatpush.msra.mxu0 %v44
  %142 = vmatpush.msra.mxu0 %v43
  %143 = vmatpush.msra.mxu0 %v42
  %144 = vmatpush.msra.mxu0 %v41
  %145 = vmatpush.msra.mxu0 %v40
  %146 = vmatpush.msra.mxu0 %v39
  %147 = vmatpush.msra.mxu0 %v38
  %148 = vmatpush.msra.mxu0 %v37
  %149 = vmatpush.msra.mxu0 %v36
  %150 = vmatpush.msra.mxu0 %v35
  %151 = vmatpush.msra.mxu0 %v34
  %152 = vmatpush.msra.mxu0 %v33
  %153 = vmatmul.f32.gmra.mxu0 %v17
  %v154 = vpop.f32.mrf.mxu0
  %v155 = vadd.f32 %v126, %v154
  %156 = vmatmul.f32.gmra.mxu0 %v18
  %v157 = vpop.f32.mrf.mxu0
  %v158 = vadd.f32 %v129, %v157
  %159 = vmatmul.f32.gmra.mxu0 %v28
  %v160 = vpop.f32.mrf.mxu0
  %v161 = vadd.f32 %v132, %v160
  %162 = vmatmul.f32.gmra.mxu0 %v30
  %v163 = vpop.f32.mrf.mxu0
  %v164 = vadd.f32 %v135, %v163
  %165 = vdwg.mxu0
  %s166 = scalar_lea.vmem %s1, 256
  %v167 = vld [vmem:[%s166] sm:$0xff]
  %v168 = vld [vmem:[%s166 + $0x8] sm:$0xff]
  %v169 = vld [vmem:[%s166 + $0x10] sm:$0xff]
  %v170 = vld [vmem:[%s166 + $0x18] sm:$0xff]
  %v171 = vld [vmem:[%s166 + $0x20] sm:$0xff]
  %v172 = vld [vmem:[%s166 + $0x28] sm:$0xff]
  %v173 = vld [vmem:[%s166 + $0x30] sm:$0xff]
  %v174 = vld [vmem:[%s166 + $0x38] sm:$0xff]
  %v175 = vld [vmem:[%s166 + $0x40] sm:$0xff]
  %v176 = vld [vmem:[%s166 + $0x48] sm:$0xff]
  %v177 = vld [vmem:[%s166 + $0x50] sm:$0xff]
  %v178 = vld [vmem:[%s166 + $0x58] sm:$0xff]
  %v179 = vld [vmem:[%s166 + $0x60] sm:$0xff]
  %v180 = vld [vmem:[%s166 + $0x68] sm:$0xff]
  %v181 = vld [vmem:[%s166 + $0x70] sm:$0xff]
  %v182 = vld [vmem:[%s166 + $0x78] sm:$0xff]
  %183 = vrot.lane.b32.xlu0 %v17, 112
  %v184 = vpop.permute.xlu0 %183
  %185 = vrot.lane.b32.xlu0 %v49, 112
  %v186 = vpop.permute.xlu0 %185
  %187 = vrot.lane.b32.xlu0 %v18, 112
  %v188 = vpop.permute.xlu0 %187
  %189 = vrot.lane.b32.xlu0 %v50, 112
  %v190 = vpop.permute.xlu0 %189
  %191 = vrot.lane.b32.xlu0 %v28, 112
  %v192 = vpop.permute.xlu0 %191
  %193 = vrot.lane.b32.xlu0 %v59, 112
  %v194 = vpop.permute.xlu0 %193
  %195 = vrot.lane.b32.xlu0 %v30, 112
  %v196 = vpop.permute.xlu0 %195
  %197 = vrot.lane.b32.xlu0 %v61, 112
  %v198 = vpop.permute.xlu0 %197
  %vm199 = vcmask 916480
  %v200 = vsel %vm199, %v184, %v186
  %v201 = vsel %vm199, %v188, %v190
  %v202 = vsel %vm199, %v192, %v194
  %v203 = vsel %vm199, %v196, %v198
  %208 = vmatpush.msra.mxu0 %v182
  %209 = vmatpush.msra.mxu0 %v181
  %210 = vmatpush.msra.mxu0 %v180
  %211 = vmatpush.msra.mxu0 %v179
  %212 = vmatpush.msra.mxu0 %v178
  %213 = vmatpush.msra.mxu0 %v177
  %214 = vmatpush.msra.mxu0 %v176
  %215 = vmatpush.msra.mxu0 %v175
  %216 = vmatpush.msra.mxu0 %v174
  %217 = vmatpush.msra.mxu0 %v173
  %218 = vmatpush.msra.mxu0 %v172
  %219 = vmatpush.msra.mxu0 %v171
  %220 = vmatpush.msra.mxu0 %v170
  %221 = vmatpush.msra.mxu0 %v169
  %222 = vmatpush.msra.mxu0 %v168
  %223 = vmatpush.msra.mxu0 %v167
  %224 = vmatmul.f32.gmra.mxu0 %v200
  %v225 = vpop.f32.mrf.mxu0
  %v226 = vadd.f32 0.0, %v225
  %227 = vmatmul.f32.gmra.mxu0 %v201
  %v228 = vpop.f32.mrf.mxu0
  %v229 = vadd.f32 0.0, %v228
  %230 = vmatmul.f32.gmra.mxu0 %v202
  %v231 = vpop.f32.mrf.mxu0
  %v232 = vadd.f32 0.0, %v231
  %233 = vmatmul.f32.gmra.mxu0 %v203
  %v234 = vpop.f32.mrf.mxu0
  %v235 = vadd.f32 0.0, %v234
  %236 = vdwg.mxu0
  %v237 = vadd.f32 %v155, %v226
  %v238 = vadd.f32 %v158, %v229
  %v239 = vadd.f32 %v161, %v232
  %v240 = vadd.f32 %v164, %v235
  %v241 = vld [vmem:[%s0] sm:$0xfe]
  %v242 = vld [vmem:[%s0 + $0x10] sm:$0xff]
  %v243 = vld [vmem:[%s0 + $0x20] sm:$0x1]
  %v244 = vld [vmem:[%s0 + $0x20] sm:$0xf8]
  %v245 = vld [vmem:[%s0 + $0x40] sm:$0x7]
  %vm249 = vcmask 1046528
  %v250 = vrot.slane %v241, 1
  %v251 = vrot.slane %v242, 1
  %v252 = vsel %vm249, %v250, %v251
  %v253 = vrot.slane %v243, 1
  %v254 = vsel %vm249, %v251, %v253
  %vm259 = vcmask 1044480
  %v260 = vrot.slane %v244, 3
  %v261 = vrot.slane %v20, 3
  %v262 = vsel %vm259, %v260, %v261
  %v263 = vrot.slane %v245, 3
  %v264 = vsel %vm259, %v261, %v263
  %s267 = scalar_lea.vmem %s1, 384
  %v268 = vld [vmem:[%s267] sm:$0xff]
  %v269 = vld [vmem:[%s267 + $0x8] sm:$0xff]
  %v270 = vld [vmem:[%s267 + $0x10] sm:$0xff]
  %v271 = vld [vmem:[%s267 + $0x18] sm:$0xff]
  %v272 = vld [vmem:[%s267 + $0x20] sm:$0xff]
  %v273 = vld [vmem:[%s267 + $0x28] sm:$0xff]
  %v274 = vld [vmem:[%s267 + $0x30] sm:$0xff]
  %v275 = vld [vmem:[%s267 + $0x38] sm:$0xff]
  %v276 = vld [vmem:[%s267 + $0x40] sm:$0xff]
  %v277 = vld [vmem:[%s267 + $0x48] sm:$0xff]
  %v278 = vld [vmem:[%s267 + $0x50] sm:$0xff]
  %v279 = vld [vmem:[%s267 + $0x58] sm:$0xff]
  %v280 = vld [vmem:[%s267 + $0x60] sm:$0xff]
  %v281 = vld [vmem:[%s267 + $0x68] sm:$0xff]
  %v282 = vld [vmem:[%s267 + $0x70] sm:$0xff]
  %v283 = vld [vmem:[%s267 + $0x78] sm:$0xff]
  %284 = vmatpush.msra.mxu0 %v283
  %285 = vmatpush.msra.mxu0 %v282
  %286 = vmatpush.msra.mxu0 %v281
  %287 = vmatpush.msra.mxu0 %v280
  %288 = vmatpush.msra.mxu0 %v279
  %289 = vmatpush.msra.mxu0 %v278
  %290 = vmatpush.msra.mxu0 %v277
  %291 = vmatpush.msra.mxu0 %v276
  %292 = vmatpush.msra.mxu0 %v275
  %293 = vmatpush.msra.mxu0 %v274
  %294 = vmatpush.msra.mxu0 %v273
  %295 = vmatpush.msra.mxu0 %v272
  %296 = vmatpush.msra.mxu0 %v271
  %297 = vmatpush.msra.mxu0 %v270
  %298 = vmatpush.msra.mxu0 %v269
  %299 = vmatpush.msra.mxu0 %v268
  %300 = vmatmul.f32.gmra.mxu0 %v252
  %v301 = vpop.f32.mrf.mxu0
  %v302 = vadd.f32 0.0, %v301
  %303 = vmatmul.f32.gmra.mxu0 %v254
  %v304 = vpop.f32.mrf.mxu0
  %v305 = vadd.f32 0.0, %v304
  %306 = vmatmul.f32.gmra.mxu0 %v262
  %v307 = vpop.f32.mrf.mxu0
  %v308 = vadd.f32 0.0, %v307
  %309 = vmatmul.f32.gmra.mxu0 %v264
  %v310 = vpop.f32.mrf.mxu0
  %v311 = vadd.f32 0.0, %v310
  %312 = vdwg.mxu0
  %v313 = vadd.f32 %v237, %v302
  %v314 = vadd.f32 %v238, %v305
  %v315 = vadd.f32 %v239, %v308
  %v316 = vadd.f32 %v240, %v311
  %v317 = vld [vmem:[%s0] sm:$0xfe]
  %v318 = vld [vmem:[%s0 + $0x8] sm:$0xfe]
  %v319 = vld [vmem:[%s0 + $0x10] sm:$0xff]
  %v320 = vld [vmem:[%s0 + $0x18] sm:$0xff]
  %v321 = vld [vmem:[%s0 + $0x20] sm:$0x1]
  %v322 = vld [vmem:[%s0 + $0x28] sm:$0x1]
  %v323 = vld [vmem:[%s0 + $0x20] sm:$0xf8]
  %v324 = vld [vmem:[%s0 + $0x28] sm:$0xf8]
  %v325 = vld [vmem:[%s0 + $0x40] sm:$0x7]
  %v326 = vld [vmem:[%s0 + $0x48] sm:$0x7]
  %v333 = vrot.slane %v317, 1
  %v334 = vrot.slane %v319, 1
  %v335 = vsel %vm249, %v333, %v334
  %v336 = vrot.slane %v318, 1
  %v337 = vrot.slane %v320, 1
  %v338 = vsel %vm249, %v336, %v337
  %v339 = vrot.slane %v321, 1
  %v340 = vsel %vm249, %v334, %v339
  %v341 = vrot.slane %v322, 1
  %v342 = vsel %vm249, %v337, %v341
  %v347 = vrot.slane %v323, 3
  %v348 = vsel %vm259, %v347, %v261
  %v349 = vrot.slane %v324, 3
  %v350 = vrot.slane %v52, 3
  %v351 = vsel %vm259, %v349, %v350
  %v352 = vrot.slane %v325, 3
  %v353 = vsel %vm259, %v261, %v352
  %v354 = vrot.slane %v326, 3
  %v355 = vsel %vm259, %v350, %v354
  %s356 = scalar_lea.vmem %s1, 512
  %v357 = vld [vmem:[%s356] sm:$0xff]
  %v358 = vld [vmem:[%s356 + $0x8] sm:$0xff]
  %v359 = vld [vmem:[%s356 + $0x10] sm:$0xff]
  %v360 = vld [vmem:[%s356 + $0x18] sm:$0xff]
  %v361 = vld [vmem:[%s356 + $0x20] sm:$0xff]
  %v362 = vld [vmem:[%s356 + $0x28] sm:$0xff]
  %v363 = vld [vmem:[%s356 + $0x30] sm:$0xff]
  %v364 = vld [vmem:[%s356 + $0x38] sm:$0xff]
  %v365 = vld [vmem:[%s356 + $0x40] sm:$0xff]
  %v366 = vld [vmem:[%s356 + $0x48] sm:$0xff]
  %v367 = vld [vmem:[%s356 + $0x50] sm:$0xff]
  %v368 = vld [vmem:[%s356 + $0x58] sm:$0xff]
  %v369 = vld [vmem:[%s356 + $0x60] sm:$0xff]
  %v370 = vld [vmem:[%s356 + $0x68] sm:$0xff]
  %v371 = vld [vmem:[%s356 + $0x70] sm:$0xff]
  %v372 = vld [vmem:[%s356 + $0x78] sm:$0xff]
  %373 = vrot.lane.b32.xlu0 %v335, 120
  %v374 = vpop.permute.xlu0 %373
  %375 = vrot.lane.b32.xlu0 %v338, 120
  %v376 = vpop.permute.xlu0 %375
  %377 = vrot.lane.b32.xlu0 %v340, 120
  %v378 = vpop.permute.xlu0 %377
  %379 = vrot.lane.b32.xlu0 %v342, 120
  %v380 = vpop.permute.xlu0 %379
  %381 = vrot.lane.b32.xlu0 %v348, 120
  %v382 = vpop.permute.xlu0 %381
  %383 = vrot.lane.b32.xlu0 %v351, 120
  %v384 = vpop.permute.xlu0 %383
  %385 = vrot.lane.b32.xlu0 %v353, 120
  %v386 = vpop.permute.xlu0 %385
  %387 = vrot.lane.b32.xlu0 %v355, 120
  %v388 = vpop.permute.xlu0 %387
  %v389 = vsel %vm99, %v374, %v376
  %v390 = vsel %vm99, %v378, %v380
  %v391 = vsel %vm99, %v382, %v384
  %v392 = vsel %vm99, %v386, %v388
  %397 = vmatpush.msra.mxu0 %v372
  %398 = vmatpush.msra.mxu0 %v371
  %399 = vmatpush.msra.mxu0 %v370
  %400 = vmatpush.msra.mxu0 %v369
  %401 = vmatpush.msra.mxu0 %v368
  %402 = vmatpush.msra.mxu0 %v367
  %403 = vmatpush.msra.mxu0 %v366
  %404 = vmatpush.msra.mxu0 %v365
  %405 = vmatpush.msra.mxu0 %v364
  %406 = vmatpush.msra.mxu0 %v363
  %407 = vmatpush.msra.mxu0 %v362
  %408 = vmatpush.msra.mxu0 %v361
  %409 = vmatpush.msra.mxu0 %v360
  %410 = vmatpush.msra.mxu0 %v359
  %411 = vmatpush.msra.mxu0 %v358
  %412 = vmatpush.msra.mxu0 %v357
  %413 = vmatmul.f32.gmra.mxu0 %v389
  %v414 = vpop.f32.mrf.mxu0
  %v415 = vadd.f32 0.0, %v414
  %416 = vmatmul.f32.gmra.mxu0 %v390
  %v417 = vpop.f32.mrf.mxu0
  %v418 = vadd.f32 0.0, %v417
  %419 = vmatmul.f32.gmra.mxu0 %v391
  %v420 = vpop.f32.mrf.mxu0
  %v421 = vadd.f32 0.0, %v420
  %422 = vmatmul.f32.gmra.mxu0 %v392
  %v423 = vpop.f32.mrf.mxu0
  %v424 = vadd.f32 0.0, %v423
  %425 = vdwg.mxu0
  %v426 = vadd.f32 %v313, %v415
  %v427 = vadd.f32 %v314, %v418
  %v428 = vadd.f32 %v315, %v421
  %v429 = vadd.f32 %v316, %v424
  %s430 = scalar_lea.vmem %s1, 640
  %v431 = vld [vmem:[%s430] sm:$0xff]
  %v432 = vld [vmem:[%s430 + $0x8] sm:$0xff]
  %v433 = vld [vmem:[%s430 + $0x10] sm:$0xff]
  %v434 = vld [vmem:[%s430 + $0x18] sm:$0xff]
  %v435 = vld [vmem:[%s430 + $0x20] sm:$0xff]
  %v436 = vld [vmem:[%s430 + $0x28] sm:$0xff]
  %v437 = vld [vmem:[%s430 + $0x30] sm:$0xff]
  %v438 = vld [vmem:[%s430 + $0x38] sm:$0xff]
  %v439 = vld [vmem:[%s430 + $0x40] sm:$0xff]
  %v440 = vld [vmem:[%s430 + $0x48] sm:$0xff]
  %v441 = vld [vmem:[%s430 + $0x50] sm:$0xff]
  %v442 = vld [vmem:[%s430 + $0x58] sm:$0xff]
  %v443 = vld [vmem:[%s430 + $0x60] sm:$0xff]
  %v444 = vld [vmem:[%s430 + $0x68] sm:$0xff]
  %v445 = vld [vmem:[%s430 + $0x70] sm:$0xff]
  %v446 = vld [vmem:[%s430 + $0x78] sm:$0xff]
  %447 = vrot.lane.b32.xlu0 %v335, 112
  %v448 = vpop.permute.xlu0 %447
  %449 = vrot.lane.b32.xlu0 %v338, 112
  %v450 = vpop.permute.xlu0 %449
  %451 = vrot.lane.b32.xlu0 %v340, 112
  %v452 = vpop.permute.xlu0 %451
  %453 = vrot.lane.b32.xlu0 %v342, 112
  %v454 = vpop.permute.xlu0 %453
  %455 = vrot.lane.b32.xlu0 %v348, 112
  %v456 = vpop.permute.xlu0 %455
  %457 = vrot.lane.b32.xlu0 %v351, 112
  %v458 = vpop.permute.xlu0 %457
  %459 = vrot.lane.b32.xlu0 %v353, 112
  %v460 = vpop.permute.xlu0 %459
  %461 = vrot.lane.b32.xlu0 %v355, 112
  %v462 = vpop.permute.xlu0 %461
  %v463 = vsel %vm199, %v448, %v450
  %v464 = vsel %vm199, %v452, %v454
  %v465 = vsel %vm199, %v456, %v458
  %v466 = vsel %vm199, %v460, %v462
  %471 = vmatpush.msra.mxu0 %v446
  %472 = vmatpush.msra.mxu0 %v445
  %473 = vmatpush.msra.mxu0 %v444
  %474 = vmatpush.msra.mxu0 %v443
  %475 = vmatpush.msra.mxu0 %v442
  %476 = vmatpush.msra.mxu0 %v441
  %477 = vmatpush.msra.mxu0 %v440
  %478 = vmatpush.msra.mxu0 %v439
  %479 = vmatpush.msra.mxu0 %v438
  %480 = vmatpush.msra.mxu0 %v437
  %481 = vmatpush.msra.mxu0 %v436
  %482 = vmatpush.msra.mxu0 %v435
  %483 = vmatpush.msra.mxu0 %v434
  %484 = vmatpush.msra.mxu0 %v433
  %485 = vmatpush.msra.mxu0 %v432
  %486 = vmatpush.msra.mxu0 %v431
  %487 = vmatmul.f32.gmra.mxu0 %v463
  %v488 = vpop.f32.mrf.mxu0
  %v489 = vadd.f32 0.0, %v488
  %490 = vmatmul.f32.gmra.mxu0 %v464
  %v491 = vpop.f32.mrf.mxu0
  %v492 = vadd.f32 0.0, %v491
  %493 = vmatmul.f32.gmra.mxu0 %v465
  %v494 = vpop.f32.mrf.mxu0
  %v495 = vadd.f32 0.0, %v494
  %496 = vmatmul.f32.gmra.mxu0 %v466
  %v497 = vpop.f32.mrf.mxu0
  %v498 = vadd.f32 0.0, %v497
  %499 = vdwg.mxu0
  %v500 = vadd.f32 %v426, %v489
  %v501 = vadd.f32 %v427, %v492
  %v502 = vadd.f32 %v428, %v495
  %v503 = vadd.f32 %v429, %v498
  %v504 = vld [vmem:[%s0] sm:$0xfc]
  %v505 = vld [vmem:[%s0 + $0x20] sm:$0x3]
  %v506 = vld [vmem:[%s0 + $0x20] sm:$0xf0]
  %v507 = vld [vmem:[%s0 + $0x40] sm:$0xf]
  %v510 = vrot.slane %v504, 2
  %v511 = vrot.slane %v242, 2
  %v512 = vsel %vm25, %v510, %v511
  %v513 = vrot.slane %v505, 2
  %v514 = vsel %vm25, %v511, %v513
  %vm519 = vcmask 1043456
  %v520 = vrot.slane %v506, 4
  %v521 = vrot.slane %v20, 4
  %v522 = vsel %vm519, %v520, %v521
  %v523 = vrot.slane %v507, 4
  %v524 = vsel %vm519, %v521, %v523
  %s527 = scalar_lea.vmem %s1, 768
  %v528 = vld [vmem:[%s527] sm:$0xff]
  %v529 = vld [vmem:[%s527 + $0x8] sm:$0xff]
  %v530 = vld [vmem:[%s527 + $0x10] sm:$0xff]
  %v531 = vld [vmem:[%s527 + $0x18] sm:$0xff]
  %v532 = vld [vmem:[%s527 + $0x20] sm:$0xff]
  %v533 = vld [vmem:[%s527 + $0x28] sm:$0xff]
  %v534 = vld [vmem:[%s527 + $0x30] sm:$0xff]
  %v535 = vld [vmem:[%s527 + $0x38] sm:$0xff]
  %v536 = vld [vmem:[%s527 + $0x40] sm:$0xff]
  %v537 = vld [vmem:[%s527 + $0x48] sm:$0xff]
  %v538 = vld [vmem:[%s527 + $0x50] sm:$0xff]
  %v539 = vld [vmem:[%s527 + $0x58] sm:$0xff]
  %v540 = vld [vmem:[%s527 + $0x60] sm:$0xff]
  %v541 = vld [vmem:[%s527 + $0x68] sm:$0xff]
  %v542 = vld [vmem:[%s527 + $0x70] sm:$0xff]
  %v543 = vld [vmem:[%s527 + $0x78] sm:$0xff]
  %544 = vmatpush.msra.mxu0 %v543
  %545 = vmatpush.msra.mxu0 %v542
  %546 = vmatpush.msra.mxu0 %v541
  %547 = vmatpush.msra.mxu0 %v540
  %548 = vmatpush.msra.mxu0 %v539
  %549 = vmatpush.msra.mxu0 %v538
  %550 = vmatpush.msra.mxu0 %v537
  %551 = vmatpush.msra.mxu0 %v536
  %552 = vmatpush.msra.mxu0 %v535
  %553 = vmatpush.msra.mxu0 %v534
  %554 = vmatpush.msra.mxu0 %v533
  %555 = vmatpush.msra.mxu0 %v532
  %556 = vmatpush.msra.mxu0 %v531
  %557 = vmatpush.msra.mxu0 %v530
  %558 = vmatpush.msra.mxu0 %v529
  %559 = vmatpush.msra.mxu0 %v528
  %560 = vmatmul.f32.gmra.mxu0 %v512
  %v561 = vpop.f32.mrf.mxu0
  %v562 = vadd.f32 0.0, %v561
  %563 = vmatmul.f32.gmra.mxu0 %v514
  %v564 = vpop.f32.mrf.mxu0
  %v565 = vadd.f32 0.0, %v564
  %566 = vmatmul.f32.gmra.mxu0 %v522
  %v567 = vpop.f32.mrf.mxu0
  %v568 = vadd.f32 0.0, %v567
  %569 = vmatmul.f32.gmra.mxu0 %v524
  %v570 = vpop.f32.mrf.mxu0
  %v571 = vadd.f32 0.0, %v570
  %572 = vdwg.mxu0
  %v573 = vadd.f32 %v500, %v562
  %v574 = vadd.f32 %v501, %v565
  %v575 = vadd.f32 %v502, %v568
  %v576 = vadd.f32 %v503, %v571
  %v577 = vld [vmem:[%s0] sm:$0xfc]
  %v578 = vld [vmem:[%s0 + $0x8] sm:$0xfc]
  %v579 = vld [vmem:[%s0 + $0x20] sm:$0x3]
  %v580 = vld [vmem:[%s0 + $0x28] sm:$0x3]
  %v581 = vld [vmem:[%s0 + $0x20] sm:$0xf0]
  %v582 = vld [vmem:[%s0 + $0x28] sm:$0xf0]
  %v583 = vld [vmem:[%s0 + $0x40] sm:$0xf]
  %v584 = vld [vmem:[%s0 + $0x48] sm:$0xf]
  %v589 = vrot.slane %v577, 2
  %v590 = vrot.slane %v319, 2
  %v591 = vsel %vm25, %v589, %v590
  %v592 = vrot.slane %v578, 2
  %v593 = vrot.slane %v320, 2
  %v594 = vsel %vm25, %v592, %v593
  %v595 = vrot.slane %v579, 2
  %v596 = vsel %vm25, %v590, %v595
  %v597 = vrot.slane %v580, 2
  %v598 = vsel %vm25, %v593, %v597
  %v603 = vrot.slane %v581, 4
  %v604 = vsel %vm519, %v603, %v521
  %v605 = vrot.slane %v582, 4
  %v606 = vrot.slane %v52, 4
  %v607 = vsel %vm519, %v605, %v606
  %v608 = vrot.slane %v583, 4
  %v609 = vsel %vm519, %v521, %v608
  %v610 = vrot.slane %v584, 4
  %v611 = vsel %vm519, %v606, %v610
  %s612 = scalar_lea.vmem %s1, 896
  %v613 = vld [vmem:[%s612] sm:$0xff]
  %v614 = vld [vmem:[%s612 + $0x8] sm:$0xff]
  %v615 = vld [vmem:[%s612 + $0x10] sm:$0xff]
  %v616 = vld [vmem:[%s612 + $0x18] sm:$0xff]
  %v617 = vld [vmem:[%s612 + $0x20] sm:$0xff]
  %v618 = vld [vmem:[%s612 + $0x28] sm:$0xff]
  %v619 = vld [vmem:[%s612 + $0x30] sm:$0xff]
  %v620 = vld [vmem:[%s612 + $0x38] sm:$0xff]
  %v621 = vld [vmem:[%s612 + $0x40] sm:$0xff]
  %v622 = vld [vmem:[%s612 + $0x48] sm:$0xff]
  %v623 = vld [vmem:[%s612 + $0x50] sm:$0xff]
  %v624 = vld [vmem:[%s612 + $0x58] sm:$0xff]
  %v625 = vld [vmem:[%s612 + $0x60] sm:$0xff]
  %v626 = vld [vmem:[%s612 + $0x68] sm:$0xff]
  %v627 = vld [vmem:[%s612 + $0x70] sm:$0xff]
  %v628 = vld [vmem:[%s612 + $0x78] sm:$0xff]
  %629 = vrot.lane.b32.xlu0 %v591, 120
  %v630 = vpop.permute.xlu0 %629
  %631 = vrot.lane.b32.xlu0 %v594, 120
  %v632 = vpop.permute.xlu0 %631
  %633 = vrot.lane.b32.xlu0 %v596, 120
  %v634 = vpop.permute.xlu0 %633
  %635 = vrot.lane.b32.xlu0 %v598, 120
  %v636 = vpop.permute.xlu0 %635
  %637 = vrot.lane.b32.xlu0 %v604, 120
  %v638 = vpop.permute.xlu0 %637
  %639 = vrot.lane.b32.xlu0 %v607, 120
  %v640 = vpop.permute.xlu0 %639
  %641 = vrot.lane.b32.xlu0 %v609, 120
  %v642 = vpop.permute.xlu0 %641
  %643 = vrot.lane.b32.xlu0 %v611, 120
  %v644 = vpop.permute.xlu0 %643
  %v645 = vsel %vm99, %v630, %v632
  %v646 = vsel %vm99, %v634, %v636
  %v647 = vsel %vm99, %v638, %v640
  %v648 = vsel %vm99, %v642, %v644
  %653 = vmatpush.msra.mxu0 %v628
  %654 = vmatpush.msra.mxu0 %v627
  %655 = vmatpush.msra.mxu0 %v626
  %656 = vmatpush.msra.mxu0 %v625
  %657 = vmatpush.msra.mxu0 %v624
  %658 = vmatpush.msra.mxu0 %v623
  %659 = vmatpush.msra.mxu0 %v622
  %660 = vmatpush.msra.mxu0 %v621
  %661 = vmatpush.msra.mxu0 %v620
  %662 = vmatpush.msra.mxu0 %v619
  %663 = vmatpush.msra.mxu0 %v618
  %664 = vmatpush.msra.mxu0 %v617
  %665 = vmatpush.msra.mxu0 %v616
  %666 = vmatpush.msra.mxu0 %v615
  %667 = vmatpush.msra.mxu0 %v614
  %668 = vmatpush.msra.mxu0 %v613
  %669 = vmatmul.f32.gmra.mxu0 %v645
  %v670 = vpop.f32.mrf.mxu0
  %v671 = vadd.f32 0.0, %v670
  %672 = vmatmul.f32.gmra.mxu0 %v646
  %v673 = vpop.f32.mrf.mxu0
  %v674 = vadd.f32 0.0, %v673
  %675 = vmatmul.f32.gmra.mxu0 %v647
  %v676 = vpop.f32.mrf.mxu0
  %v677 = vadd.f32 0.0, %v676
  %678 = vmatmul.f32.gmra.mxu0 %v648
  %v679 = vpop.f32.mrf.mxu0
  %v680 = vadd.f32 0.0, %v679
  %681 = vdwg.mxu0
  %v682 = vadd.f32 %v573, %v671
  %v683 = vadd.f32 %v574, %v674
  %v684 = vadd.f32 %v575, %v677
  %v685 = vadd.f32 %v576, %v680
  %s686 = scalar_lea.vmem %s1, 1024
  %v687 = vld [vmem:[%s686] sm:$0xff]
  %v688 = vld [vmem:[%s686 + $0x8] sm:$0xff]
  %v689 = vld [vmem:[%s686 + $0x10] sm:$0xff]
  %v690 = vld [vmem:[%s686 + $0x18] sm:$0xff]
  %v691 = vld [vmem:[%s686 + $0x20] sm:$0xff]
  %v692 = vld [vmem:[%s686 + $0x28] sm:$0xff]
  %v693 = vld [vmem:[%s686 + $0x30] sm:$0xff]
  %v694 = vld [vmem:[%s686 + $0x38] sm:$0xff]
  %v695 = vld [vmem:[%s686 + $0x40] sm:$0xff]
  %v696 = vld [vmem:[%s686 + $0x48] sm:$0xff]
  %v697 = vld [vmem:[%s686 + $0x50] sm:$0xff]
  %v698 = vld [vmem:[%s686 + $0x58] sm:$0xff]
  %v699 = vld [vmem:[%s686 + $0x60] sm:$0xff]
  %v700 = vld [vmem:[%s686 + $0x68] sm:$0xff]
  %v701 = vld [vmem:[%s686 + $0x70] sm:$0xff]
  %v702 = vld [vmem:[%s686 + $0x78] sm:$0xff]
  %703 = vrot.lane.b32.xlu0 %v591, 112
  %v704 = vpop.permute.xlu0 %703
  %705 = vrot.lane.b32.xlu0 %v594, 112
  %v706 = vpop.permute.xlu0 %705
  %707 = vrot.lane.b32.xlu0 %v596, 112
  %v708 = vpop.permute.xlu0 %707
  %709 = vrot.lane.b32.xlu0 %v598, 112
  %v710 = vpop.permute.xlu0 %709
  %711 = vrot.lane.b32.xlu0 %v604, 112
  %v712 = vpop.permute.xlu0 %711
  %713 = vrot.lane.b32.xlu0 %v607, 112
  %v714 = vpop.permute.xlu0 %713
  %715 = vrot.lane.b32.xlu0 %v609, 112
  %v716 = vpop.permute.xlu0 %715
  %717 = vrot.lane.b32.xlu0 %v611, 112
  %v718 = vpop.permute.xlu0 %717
  %v719 = vsel %vm199, %v704, %v706
  %v720 = vsel %vm199, %v708, %v710
  %v721 = vsel %vm199, %v712, %v714
  %v722 = vsel %vm199, %v716, %v718
  %727 = vmatpush.msra.mxu0 %v702
  %728 = vmatpush.msra.mxu0 %v701
  %729 = vmatpush.msra.mxu0 %v700
  %730 = vmatpush.msra.mxu0 %v699
  %731 = vmatpush.msra.mxu0 %v698
  %732 = vmatpush.msra.mxu0 %v697
  %733 = vmatpush.msra.mxu0 %v696
  %734 = vmatpush.msra.mxu0 %v695
  %735 = vmatpush.msra.mxu0 %v694
  %736 = vmatpush.msra.mxu0 %v693
  %737 = vmatpush.msra.mxu0 %v692
  %738 = vmatpush.msra.mxu0 %v691
  %739 = vmatpush.msra.mxu0 %v690
  %740 = vmatpush.msra.mxu0 %v689
  %741 = vmatpush.msra.mxu0 %v688
  %742 = vmatpush.msra.mxu0 %v687
  %743 = vmatmul.f32.gmra.mxu0 %v719
  %v744 = vpop.f32.mrf.mxu0
  %v745 = vadd.f32 0.0, %v744
  %746 = vmatmul.f32.gmra.mxu0 %v720
  %v747 = vpop.f32.mrf.mxu0
  %v748 = vadd.f32 0.0, %v747
  %749 = vmatmul.f32.gmra.mxu0 %v721
  %v750 = vpop.f32.mrf.mxu0
  %v751 = vadd.f32 0.0, %v750
  %752 = vmatmul.f32.gmra.mxu0 %v722
  %v753 = vpop.f32.mrf.mxu0
  %v754 = vadd.f32 0.0, %v753
  %755 = vdwg.mxu0
  %v756 = vadd.f32 %v682, %v745
  %v757 = vadd.f32 %v683, %v748
  %v758 = vadd.f32 %v684, %v751
  %v759 = vadd.f32 %v685, %v754
  %v760 = vlaneseq
  %v761 = vshrl.u32 %v760, 7
  %v762 = vadd.s32 %v761, 8
  %v763 = vadd.s32 %v761, 16
  %v764 = vadd.s32 %v761, 24
  %v765 = vadd.s32 %v761, 32
  %v766 = vadd.s32 %v761, 40
  %v767 = vadd.s32 %v761, 48
  %v768 = vadd.s32 %v761, 56
  %v769 = vadd.s32 %v761, 64
  %v770 = vadd.s32 %v761, 72
  %v771 = vadd.s32 %v761, 80
  %v772 = vadd.s32 %v761, 88
  %v773 = vadd.s32 %v761, 96
  %v774 = vadd.s32 %v761, 104
  %v775 = vadd.s32 %v761, 112
  %v776 = vadd.s32 %v761, 120
  %v777 = vlaneseq
  %v778 = vand.u32 %v777, 127
  %vm779 = vcmp.lt.s32.totalorder %v761, 0
  %v780 = vsub.s32 0, %v761
  %v781 = vsel %vm779, %v780, %v761
  %v782 = vshrl.u32 %v781, 3
  %v783 = vand.u32 %v781, 7
  %v784 = vsub.s32 0, %v783
  %v785 = vsel %vm779, %v784, %v783
  %vm786 = vcmp.lt.s32.totalorder %v762, 0
  %v787 = vsub.s32 0, %v762
  %v788 = vsel %vm786, %v787, %v762
  %v789 = vshrl.u32 %v788, 3
  %v790 = vand.u32 %v788, 7
  %v791 = vsub.s32 0, %v790
  %v792 = vsel %vm786, %v791, %v790
  %vm793 = vcmp.lt.s32.totalorder %v763, 0
  %v794 = vsub.s32 0, %v763
  %v795 = vsel %vm793, %v794, %v763
  %v796 = vshrl.u32 %v795, 3
  %v797 = vand.u32 %v795, 7
  %v798 = vsub.s32 0, %v797
  %v799 = vsel %vm793, %v798, %v797
  %vm800 = vcmp.lt.s32.totalorder %v764, 0
  %v801 = vsub.s32 0, %v764
  %v802 = vsel %vm800, %v801, %v764
  %v803 = vshrl.u32 %v802, 3
  %v804 = vand.u32 %v802, 7
  %v805 = vsub.s32 0, %v804
  %v806 = vsel %vm800, %v805, %v804
  %vm807 = vcmp.lt.s32.totalorder %v765, 0
  %v808 = vsub.s32 0, %v765
  %v809 = vsel %vm807, %v808, %v765
  %v810 = vshrl.u32 %v809, 3
  %v811 = vand.u32 %v809, 7
  %v812 = vsub.s32 0, %v811
  %v813 = vsel %vm807, %v812, %v811
  %vm814 = vcmp.lt.s32.totalorder %v766, 0
  %v815 = vsub.s32 0, %v766
  %v816 = vsel %vm814, %v815, %v766
  %v817 = vshrl.u32 %v816, 3
  %v818 = vand.u32 %v816, 7
  %v819 = vsub.s32 0, %v818
  %v820 = vsel %vm814, %v819, %v818
  %vm821 = vcmp.lt.s32.totalorder %v767, 0
  %v822 = vsub.s32 0, %v767
  %v823 = vsel %vm821, %v822, %v767
  %v824 = vshrl.u32 %v823, 3
  %v825 = vand.u32 %v823, 7
  %v826 = vsub.s32 0, %v825
  %v827 = vsel %vm821, %v826, %v825
  %vm828 = vcmp.lt.s32.totalorder %v768, 0
  %v829 = vsub.s32 0, %v768
  %v830 = vsel %vm828, %v829, %v768
  %v831 = vshrl.u32 %v830, 3
  %v832 = vand.u32 %v830, 7
  %v833 = vsub.s32 0, %v832
  %v834 = vsel %vm828, %v833, %v832
  %vm835 = vcmp.lt.s32.totalorder %v769, 0
  %v836 = vsub.s32 0, %v769
  %v837 = vsel %vm835, %v836, %v769
  %v838 = vshrl.u32 %v837, 3
  %v839 = vand.u32 %v837, 7
  %v840 = vsub.s32 0, %v839
  %v841 = vsel %vm835, %v840, %v839
  %vm842 = vcmp.lt.s32.totalorder %v770, 0
  %v843 = vsub.s32 0, %v770
  %v844 = vsel %vm842, %v843, %v770
  %v845 = vshrl.u32 %v844, 3
  %v846 = vand.u32 %v844, 7
  %v847 = vsub.s32 0, %v846
  %v848 = vsel %vm842, %v847, %v846
  %vm849 = vcmp.lt.s32.totalorder %v771, 0
  %v850 = vsub.s32 0, %v771
  %v851 = vsel %vm849, %v850, %v771
  %v852 = vshrl.u32 %v851, 3
  %v853 = vand.u32 %v851, 7
  %v854 = vsub.s32 0, %v853
  %v855 = vsel %vm849, %v854, %v853
  %vm856 = vcmp.lt.s32.totalorder %v772, 0
  %v857 = vsub.s32 0, %v772
  %v858 = vsel %vm856, %v857, %v772
  %v859 = vshrl.u32 %v858, 3
  %v860 = vand.u32 %v858, 7
  %v861 = vsub.s32 0, %v860
  %v862 = vsel %vm856, %v861, %v860
  %vm863 = vcmp.lt.s32.totalorder %v773, 0
  %v864 = vsub.s32 0, %v773
  %v865 = vsel %vm863, %v864, %v773
  %v866 = vshrl.u32 %v865, 3
  %v867 = vand.u32 %v865, 7
  %v868 = vsub.s32 0, %v867
  %v869 = vsel %vm863, %v868, %v867
  %vm870 = vcmp.lt.s32.totalorder %v774, 0
  %v871 = vsub.s32 0, %v774
  %v872 = vsel %vm870, %v871, %v774
  %v873 = vshrl.u32 %v872, 3
  %v874 = vand.u32 %v872, 7
  %v875 = vsub.s32 0, %v874
  %v876 = vsel %vm870, %v875, %v874
  %vm877 = vcmp.lt.s32.totalorder %v775, 0
  %v878 = vsub.s32 0, %v775
  %v879 = vsel %vm877, %v878, %v775
  %v880 = vshrl.u32 %v879, 3
  %v881 = vand.u32 %v879, 7
  %v882 = vsub.s32 0, %v881
  %v883 = vsel %vm877, %v882, %v881
  %vm884 = vcmp.lt.s32.totalorder %v776, 0
  %v885 = vsub.s32 0, %v776
  %v886 = vsel %vm884, %v885, %v776
  %v887 = vshrl.u32 %v886, 3
  %v888 = vand.u32 %v886, 7
  %v889 = vsub.s32 0, %v888
  %v890 = vsel %vm884, %v889, %v888
  %vm891 = vcmp.ne.s32.totalorder %v785, 0
  %vm892 = vcmp.ne.s32.totalorder %v792, 0
  %vm893 = vcmp.ne.s32.totalorder %v799, 0
  %vm894 = vcmp.ne.s32.totalorder %v806, 0
  %vm895 = vcmp.ne.s32.totalorder %v813, 0
  %vm896 = vcmp.ne.s32.totalorder %v820, 0
  %vm897 = vcmp.ne.s32.totalorder %v827, 0
  %vm898 = vcmp.ne.s32.totalorder %v834, 0
  %vm899 = vcmp.ne.s32.totalorder %v841, 0
  %vm900 = vcmp.ne.s32.totalorder %v848, 0
  %vm901 = vcmp.ne.s32.totalorder %v855, 0
  %vm902 = vcmp.ne.s32.totalorder %v862, 0
  %vm903 = vcmp.ne.s32.totalorder %v869, 0
  %vm904 = vcmp.ne.s32.totalorder %v876, 0
  %vm905 = vcmp.ne.s32.totalorder %v883, 0
  %vm906 = vcmp.ne.s32.totalorder %v890, 0
  %vm907 = vcmp.lt.s32.totalorder %v785, 0
  %vm908 = vcmp.lt.s32.totalorder %v792, 0
  %vm909 = vcmp.lt.s32.totalorder %v799, 0
  %vm910 = vcmp.lt.s32.totalorder %v806, 0
  %vm911 = vcmp.lt.s32.totalorder %v813, 0
  %vm912 = vcmp.lt.s32.totalorder %v820, 0
  %vm913 = vcmp.lt.s32.totalorder %v827, 0
  %vm914 = vcmp.lt.s32.totalorder %v834, 0
  %vm915 = vcmp.lt.s32.totalorder %v841, 0
  %vm916 = vcmp.lt.s32.totalorder %v848, 0
  %vm917 = vcmp.lt.s32.totalorder %v855, 0
  %vm918 = vcmp.lt.s32.totalorder %v862, 0
  %vm919 = vcmp.lt.s32.totalorder %v869, 0
  %vm920 = vcmp.lt.s32.totalorder %v876, 0
  %vm921 = vcmp.lt.s32.totalorder %v883, 0
  %vm922 = vcmp.lt.s32.totalorder %v890, 0
  %vm923 = vmand %vm907, %vm891
  %vm924 = vmand %vm908, %vm892
  %vm925 = vmand %vm909, %vm893
  %vm926 = vmand %vm910, %vm894
  %vm927 = vmand %vm911, %vm895
  %vm928 = vmand %vm912, %vm896
  %vm929 = vmand %vm913, %vm897
  %vm930 = vmand %vm914, %vm898
  %vm931 = vmand %vm915, %vm899
  %vm932 = vmand %vm916, %vm900
  %vm933 = vmand %vm917, %vm901
  %vm934 = vmand %vm918, %vm902
  %vm935 = vmand %vm919, %vm903
  %vm936 = vmand %vm920, %vm904
  %vm937 = vmand %vm921, %vm905
  %vm938 = vmand %vm922, %vm906
  %v939 = vadd.s32 %v785, 8
  %v940 = vadd.s32 %v792, 8
  %v941 = vadd.s32 %v799, 8
  %v942 = vadd.s32 %v806, 8
  %v943 = vadd.s32 %v813, 8
  %v944 = vadd.s32 %v820, 8
  %v945 = vadd.s32 %v827, 8
  %v946 = vadd.s32 %v834, 8
  %v947 = vadd.s32 %v841, 8
  %v948 = vadd.s32 %v848, 8
  %v949 = vadd.s32 %v855, 8
  %v950 = vadd.s32 %v862, 8
  %v951 = vadd.s32 %v869, 8
  %v952 = vadd.s32 %v876, 8
  %v953 = vadd.s32 %v883, 8
  %v954 = vadd.s32 %v890, 8
  %v955 = vsel %vm923, %v939, %v785
  %v956 = vsel %vm924, %v940, %v792
  %v957 = vsel %vm925, %v941, %v799
  %v958 = vsel %vm926, %v942, %v806
  %v959 = vsel %vm927, %v943, %v813
  %v960 = vsel %vm928, %v944, %v820
  %v961 = vsel %vm929, %v945, %v827
  %v962 = vsel %vm930, %v946, %v834
  %v963 = vsel %vm931, %v947, %v841
  %v964 = vsel %vm932, %v948, %v848
  %v965 = vsel %vm933, %v949, %v855
  %v966 = vsel %vm934, %v950, %v862
  %v967 = vsel %vm935, %v951, %v869
  %v968 = vsel %vm936, %v952, %v876
  %v969 = vsel %vm937, %v953, %v883
  %v970 = vsel %vm938, %v954, %v890
  %vm971 = vcmp.lt.s32.totalorder %v778, 0
  %v972 = vsub.s32 0, %v778
  %v973 = vsel %vm971, %v972, %v778
  %v974 = vshrl.u32 %v973, 3
  %v975 = vand.u32 %v973, 7
  %v976 = vsub.s32 0, %v975
  %v977 = vsel %vm971, %v976, %v975
  %vm978 = vcmp.ne.s32.totalorder %v977, 0
  %vm979 = vcmp.lt.s32.totalorder %v977, 0
  %vm980 = vmand %vm979, %vm978
  %v981 = vadd.s32 %v977, 8
  %v982 = vsel %vm980, %v981, %v977
  %vm983 = vcmp.eq.s32.totalorder %v955, %v982
  %vm984 = vcmp.eq.s32.totalorder %v956, %v982
  %vm985 = vcmp.eq.s32.totalorder %v957, %v982
  %vm986 = vcmp.eq.s32.totalorder %v958, %v982
  %vm987 = vcmp.eq.s32.totalorder %v959, %v982
  %vm988 = vcmp.eq.s32.totalorder %v960, %v982
  %vm989 = vcmp.eq.s32.totalorder %v961, %v982
  %vm990 = vcmp.eq.s32.totalorder %v962, %v982
  %vm991 = vcmp.eq.s32.totalorder %v963, %v982
  %vm992 = vcmp.eq.s32.totalorder %v964, %v982
  %vm993 = vcmp.eq.s32.totalorder %v965, %v982
  %vm994 = vcmp.eq.s32.totalorder %v966, %v982
  %vm995 = vcmp.eq.s32.totalorder %v967, %v982
  %vm996 = vcmp.eq.s32.totalorder %v968, %v982
  %vm997 = vcmp.eq.s32.totalorder %v969, %v982
  %vm998 = vcmp.eq.s32.totalorder %v970, %v982
  %v999 = vsel %vm983, 1.0, 0.0
  %v1000 = vsel %vm984, 1.0, 0.0
  %v1001 = vsel %vm985, 1.0, 0.0
  %v1002 = vsel %vm986, 1.0, 0.0
  %v1003 = vsel %vm987, 1.0, 0.0
  %v1004 = vsel %vm988, 1.0, 0.0
  %v1005 = vsel %vm989, 1.0, 0.0
  %v1006 = vsel %vm990, 1.0, 0.0
  %v1007 = vsel %vm991, 1.0, 0.0
  %v1008 = vsel %vm992, 1.0, 0.0
  %v1009 = vsel %vm993, 1.0, 0.0
  %v1010 = vsel %vm994, 1.0, 0.0
  %v1011 = vsel %vm995, 1.0, 0.0
  %v1012 = vsel %vm996, 1.0, 0.0
  %v1013 = vsel %vm997, 1.0, 0.0
  %v1014 = vsel %vm998, 1.0, 0.0
  %vm1015 = vcmask 261120
  %v1017 = vsel %vm1015, 1.0, 0
  %1019 = vmatpush.msra.mxu0 0.0
  %1020 = vmatpush.msra.mxu0 0.0
  %1021 = vmatpush.msra.mxu0 0.0
  %1022 = vmatpush.msra.mxu0 0.0
  %1023 = vmatpush.msra.mxu0 0.0
  %1024 = vmatpush.msra.mxu0 0.0
  %1025 = vmatpush.msra.mxu0 0.0
  %1026 = vmatpush.msra.mxu0 0.0
  %1027 = vmatpush.msra.mxu0 0.0
  %1028 = vmatpush.msra.mxu0 0.0
  %1029 = vmatpush.msra.mxu0 0.0
  %1030 = vmatpush.msra.mxu0 0.0
  %1031 = vmatpush.msra.mxu0 %v759
  %1032 = vmatpush.msra.mxu0 %v758
  %1033 = vmatpush.msra.mxu0 %v757
  %1034 = vmatpush.msra.mxu0 %v756
  %1035 = vmatmul.f32.gmra.mxu0 %v1017
  %v1036 = vpop.f32.mrf.mxu0
  %v1037 = vadd.f32 0.0, %v1036
  %1038 = vdwg.mxu0
  %1039 = vmatpush.msra.mxu0 %v1014
  %1040 = vmatpush.msra.mxu0 %v1013
  %1041 = vmatpush.msra.mxu0 %v1012
  %1042 = vmatpush.msra.mxu0 %v1011
  %1043 = vmatpush.msra.mxu0 %v1010
  %1044 = vmatpush.msra.mxu0 %v1009
  %1045 = vmatpush.msra.mxu0 %v1008
  %1046 = vmatpush.msra.mxu0 %v1007
  %1047 = vmatpush.msra.mxu0 %v1006
  %1048 = vmatpush.msra.mxu0 %v1005
  %1049 = vmatpush.msra.mxu0 %v1004
  %1050 = vmatpush.msra.mxu0 %v1003
  %1051 = vmatpush.msra.mxu0 %v1002
  %1052 = vmatpush.msra.mxu0 %v1001
  %1053 = vmatpush.msra.mxu0 %v1000
  %1054 = vmatpush.msra.mxu0 %v999
  %1055 = vmatmul.f32.gmra.mxu0 %v1037
  %v1056 = vpop.f32.mrf.mxu0
  %v1057 = vadd.f32 0.0, %v1056
  %1058 = vdwg.mxu0
  %v1059 = vmul.f32 %v1057, 0.001953125
  %v1060 = vperm.slane %v1059, 0
  %v1061 = vsub.f32 %v756, %v1060
  %v1062 = vsub.f32 %v757, %v1060
  %v1063 = vsub.f32 %v758, %v1060
  %v1064 = vsub.f32 %v759, %v1060
  %v1065 = vmul.f32 %v1061, %v1061
  %v1066 = vmul.f32 %v1062, %v1062
  %v1067 = vmul.f32 %v1063, %v1063
  %v1068 = vmul.f32 %v1064, %v1064
  %1069 = vmatpush.msra.mxu0 0.0
  %1070 = vmatpush.msra.mxu0 0.0
  %1071 = vmatpush.msra.mxu0 0.0
  %1072 = vmatpush.msra.mxu0 0.0
  %1073 = vmatpush.msra.mxu0 0.0
  %1074 = vmatpush.msra.mxu0 0.0
  %1075 = vmatpush.msra.mxu0 0.0
  %1076 = vmatpush.msra.mxu0 0.0
  %1077 = vmatpush.msra.mxu0 0.0
  %1078 = vmatpush.msra.mxu0 0.0
  %1079 = vmatpush.msra.mxu0 0.0
  %1080 = vmatpush.msra.mxu0 0.0
  %1081 = vmatpush.msra.mxu0 %v1068
  %1082 = vmatpush.msra.mxu0 %v1067
  %1083 = vmatpush.msra.mxu0 %v1066
  %1084 = vmatpush.msra.mxu0 %v1065
  %1085 = vmatmul.f32.gmra.mxu0 %v1017
  %v1086 = vpop.f32.mrf.mxu0
  %v1087 = vadd.f32 0.0, %v1086
  %1088 = vdwg.mxu0
  %1089 = vmatpush.msra.mxu0 %v1014
  %1090 = vmatpush.msra.mxu0 %v1013
  %1091 = vmatpush.msra.mxu0 %v1012
  %1092 = vmatpush.msra.mxu0 %v1011
  %1093 = vmatpush.msra.mxu0 %v1010
  %1094 = vmatpush.msra.mxu0 %v1009
  %1095 = vmatpush.msra.mxu0 %v1008
  %1096 = vmatpush.msra.mxu0 %v1007
  %1097 = vmatpush.msra.mxu0 %v1006
  %1098 = vmatpush.msra.mxu0 %v1005
  %1099 = vmatpush.msra.mxu0 %v1004
  %1100 = vmatpush.msra.mxu0 %v1003
  %1101 = vmatpush.msra.mxu0 %v1002
  %1102 = vmatpush.msra.mxu0 %v1001
  %1103 = vmatpush.msra.mxu0 %v1000
  %1104 = vmatpush.msra.mxu0 %v999
  %1105 = vmatmul.f32.gmra.mxu0 %v1087
  %v1106 = vpop.f32.mrf.mxu0
  %v1107 = vadd.f32 0.0, %v1106
  %1108 = vdwg.mxu0
  %v1109 = vmul.f32 %v1107, 0.001953125
  %v1110 = vld [vmem:[%s2] sm:$0x1]
  %v1111 = vadd.f32 %v1109, 1e-05
  %v1112 = vrsqrt.pop %v1111
  %v1113 = vmul.f32 %v1112, %v1111
  %v1114 = vmul.f32 %v1113, %v1112
  %v1115 = vmul.f32 0.5, %v1114
  %v1116 = vsub.f32 1.5, %v1115
  %v1117 = vmul.f32 %v1112, %v1116
  %vm1118 = vweird.f32 %v1111
  %vm1119 = vweird.f32 %v1112
  %vm1120 = vmor %vm1118, %vm1119
  %v1121 = vsel %vm1120, %v1112, %v1117
  %v1122 = vmul.f32 %v1110, %v1121
  %v1124 = vperm.slane %v1122, 0
  %v1126 = vmul.f32 %v1061, %v1124
  %v1127 = vmul.f32 %v1062, %v1124
  %v1128 = vmul.f32 %v1063, %v1124
  %v1129 = vmul.f32 %v1064, %v1124
  %v1130 = vld [vmem:[%s3] sm:$0x1]
  %v1132 = vperm.slane %v1130, 0
  %v1134 = vadd.f32 %v1126, %v1132
  %v1135 = vadd.f32 %v1127, %v1132
  %v1136 = vadd.f32 %v1128, %v1132
  %v1137 = vadd.f32 %v1129, %v1132
  %v1138 = vmax.f32 %v1134, 0.0
  %v1139 = vmax.f32 %v1135, 0.0
  %v1140 = vmax.f32 %v1136, 0.0
  %v1141 = vmax.f32 %v1137, 0.0
  %1142 = vst [vmem:[%s4] sm:$0xff] %v1138
  %1143 = vst [vmem:[%s4 + $0x8] sm:$0xff] %v1139
  %1144 = vst [vmem:[%s4 + $0x10] sm:$0xff] %v1140
  %1145 = vst [vmem:[%s4 + $0x18] sm:$0xff] %v1141
  // Predicated region
  $region18: #{conv2d_block_forward.2} parent=0 // pred_check
    _
  $region19: #{conv2d_block_forward.2} parent=0 // pred_check_branch
    %1147 = sbr.rel (0) target = $region21
  $region20: #{conv2d_block_forward.2} parent=0 // pred_region
    _
  $region21: #{conv2d_block_forward.2} parent=0 // pred_fallthru
    _
  // Predicated region
  $region22: #{conv2d_block_forward.2} parent=0 // pred_check
    _
  $region23: #{conv2d_block_forward.2} parent=0 // pred_check_branch
    %1149 = sbr.rel (0) target = $region25
  $region24: #{conv2d_block_forward.2} parent=0 // pred_region
    _
  $region25: #{conv2d_block_forward.2} parent=0 // pred_fallthru
    _

</llo_original>
